<compile_context>
chip_gen: v7x
topology: tpu7x:2x2x1
jax: 0.10.0
libtpu: 0.0.40
codegen_flags: <defaults>
</compile_context>

<pallas_src>
import jax
import jax.numpy as jnp
from jax.experimental import pallas as pl
from jax.experimental.pallas import tpu as pltpu


# ----------------------------- Pallas kernel --------------------------------
def _make_clam_kernel(Nt, H, D, n_valid, need_mask, acc_rows):
    """Builds the kernel closed over static tiling/masking parameters."""

    def kernel(h_ref,                                # (1, Nt, F) bf16 tile of this bag
               w1_ref, b1_ref,                       # fc: Linear(F->H) + ReLU (w1 bf16)
               wab_ref, bab_ref,                     # fused gated attention [Wa|Wb] bf16
               wc_row_ref, bc_ref,                   # attention head row (1, D), bias (1,1)
               ln_g_ref, ln_b_ref,                   # LayerNorm(H)
               w2_ref, b2_ref,                       # Linear(H -> C1) + Sigmoid
               w3_ref, b3_ref,                       # Linear(C1 -> n_classes)
               logits_ref, m_ref,                    # per-bag outputs (1,1,C), (1,1,H)
               m_sc, l_sc, acc_sc):                  # online-softmax scratch
        k = pl.program_id(1)
        nk = pl.num_programs(1)

        # --- init accumulators for this bag ----------------------------------
        @pl.when(k == 0)
        def _():
            m_sc[...] = jnp.full_like(m_sc, -jnp.inf)
            l_sc[...] = jnp.zeros_like(l_sc)
            acc_sc[...] = jnp.zeros_like(acc_sc)

        # --- attention_net on this instance tile -----------------------------
        # fc: Linear + ReLU  (Dropout == identity in eval); bf16 operands, f32 acc.
        h_tile = h_ref[0]                                                # (Nt, F) bf16
        h1 = jnp.dot(h_tile, w1_ref[...],
                     preferred_element_type=jnp.float32) + b1_ref[...]
        h1 = jnp.maximum(h1, 0.0)                                        # (Nt, H) f32

        if need_mask:
            rows = k * Nt + jax.lax.broadcasted_iota(jnp.int32, (Nt, 1), 0)
            valid = rows < n_valid                                       # (Nt, 1)
            # zero out garbage from the padded tail rows (kills NaN/Inf)
            h1 = jnp.where(valid, h1, 0.0)

        h1_bf = h1.astype(jnp.bfloat16)

        # Attn_Net_Gated, fused: [a | g] = h1 @ [W_a | W_b] + [b_a | b_b]
        ag = jnp.dot(h1_bf, wab_ref[...],
                     preferred_element_type=jnp.float32) + bab_ref[...]  # (Nt, 2D)
        a = jnp.tanh(ag[:, :D])
        g = jax.nn.sigmoid(ag[:, D:])

        # scores = W_c (a*g) + b_c as a lane reduce (1-column MXU matmul avoided).
        scores = jnp.sum((a * g) * wc_row_ref[...], axis=-1, keepdims=True) \
            + bc_ref[...]                                                # (Nt, 1) f32
        if need_mask:
            scores = jnp.where(valid, scores, -jnp.inf)

        # --- online softmax + attention pooling accumulation ------------------
        m_prev = m_sc[...]                                               # (1, 1)
        m_new = jnp.maximum(m_prev, jnp.max(scores, axis=0, keepdims=True))
        alpha = jnp.exp(m_prev - m_new)                                  # (1, 1)
        p = jnp.exp(scores - m_new)                                      # (Nt, 1) f32
        l_sc[...] = alpha * l_sc[...] + jnp.sum(p, axis=0, keepdims=True)

        ph = p * h1                                                      # (Nt, H) f32
        if acc_rows == 8:
            # sublane-resident partials: vreg-aligned adds, no per-tile XLU reduce
            partial = ph.reshape(Nt // 8, 8, H).sum(axis=0)              # (8, H)
        else:
            partial = jnp.sum(ph, axis=0, keepdims=True)                 # (1, H)
        acc_sc[...] = alpha * acc_sc[...] + partial
        m_sc[...] = m_new

        # --- finalize: normalize, LayerNorm, classifier head ------------------
        @pl.when(k == nk - 1)
        def _():
            M = jnp.sum(acc_sc[...], axis=0, keepdims=True) / l_sc[...]  # (1, H)
            mu = jnp.mean(M, axis=-1, keepdims=True)
            var = jnp.mean((M - mu) ** 2, axis=-1, keepdims=True)
            Mn = (M - mu) * jax.lax.rsqrt(var + 1e-5) * ln_g_ref[...] + ln_b_ref[...]
            z = jax.nn.sigmoid(jnp.dot(Mn, w2_ref[...],
                                       preferred_element_type=jnp.float32) + b2_ref[...])
            logits = jnp.dot(z, w3_ref[...],
                             preferred_element_type=jnp.float32) + b3_ref[...]
            logits_ref[...] = logits[None]                               # (1, 1, C)
            m_ref[...] = M[None]                                         # (1, 1, H)

    return kernel


# --------------------------- sizing helpers -----------------------------------
def _vmem_capacity_bytes():
    try:
        info = pltpu.get_tpu_info()
        cap = getattr(info, "vmem_capacity_bytes", None)
        if cap:
            return int(cap)
    except Exception:
        pass
    return 64 * 2**20  # conservative (v7x per-TensorCore)


def _pick_tiling(N, max_rows):
    """Return (Nt, K, need_mask). Nt multiple of 16 when tiling (bf16 packing)."""
    max_rows = max(16, (max_rows // 16) * 16)
    if N <= max_rows:
        return N, 1, False                      # single full-bag tile
    # Prefer an exact-divisor tile near max_rows (no tail masking) if one exists.
    nt = max_rows
    while nt >= max(16, max_rows // 2):
        if N % nt == 0:
            return nt, N // nt, False
        nt -= 16
    K = -(-N // max_rows)
    return max_rows, K, True                    # ceil-div grid + in-kernel tail mask


# ------------------------------ wrapper --------------------------------------
def clam_forward(h, params, *, max_tile_rows=None):
    """h: (B, N, F) float32.  Returns (logits, Y_prob, Y_hat, M)."""
    B, N, F = h.shape
    H = params["w1"].shape[1]
    D = params["wa"].shape[1]
    C = params["w3"].shape[1]

    # bf16 features stream (halves the dominant HBM stream); bf16 operands for
    # the two big matmuls, f32 accumulation in-kernel.  The gating branches are
    # fused into a single (H, 2D) weight / (1, 2D) bias.
    h_bf = h.astype(jnp.bfloat16)
    wab = jnp.concatenate([params["wa"], params["wb"]], axis=1).astype(jnp.bfloat16)
    bab = jnp.concatenate([params["ba"], params["bb"]], axis=1)

    weights = [
        params["w1"].astype(jnp.bfloat16), params["b1"],
        wab, bab,
        params["wc"].T, params["bc"],
        params["ln_g"], params["ln_b"],
        params["w2"], params["b2"],
        params["w3"], params["b3"],
    ]
    weight_bytes = sum(int(w.size) * w.dtype.itemsize for w in weights)

    # VMEM sizing: v7x-safe (64 MiB per TensorCore; some builds report per-chip),
    # includes the (Nt,H) f32 p*h1 temporary, leaves headroom for compiler scratch.
    vmem_cap = min(_vmem_capacity_bytes(), 64 * 2**20)
    per_row = (2 * F * 2      # double-buffered bf16 h input tile
               + 6 * H        # h1 (f32 + bf16)
               + 20 * D       # fused ag (f32) + a, g, a*g (f32)
               + 4 * H        # p*h1 f32 temporary
               + 16)          # scores / p column
    budget = int(0.6 * vmem_cap) - 2 * weight_bytes - (2 << 20)
    max_rows = max(16, budget // per_row)
    max_rows = min(max_rows, 2048)              # pipelining saturates well before this
    if max_tile_rows is not None:
        max_rows = min(max_rows, int(max_tile_rows))

    Nt, K, need_mask = _pick_tiling(N, max_rows)
    acc_rows = 8 if Nt % 8 == 0 else 1

    est = 2 * weight_bytes + Nt * per_row + (4 << 20)
    vmem_limit = int(min(0.85 * vmem_cap, max(est, 32 << 20)))

    kernel = _make_clam_kernel(Nt, H, D, N, need_mask, acc_rows)

    def h_map(b, k):
        return (b, k, 0)

    def w_map(b, k):
        return (0, 0)

    out_shape = (jax.ShapeDtypeStruct((B, 1, C), jnp.float32),
                 jax.ShapeDtypeStruct((B, 1, H), jnp.float32))
    out_specs = (pl.BlockSpec((1, 1, C), lambda b, k: (b, 0, 0)),
                 pl.BlockSpec((1, 1, H), lambda b, k: (b, 0, 0)))
    scratch_shapes = [pltpu.VMEM((1, 1), jnp.float32),        # running max
                      pltpu.VMEM((1, 1), jnp.float32),        # running exp-sum
                      pltpu.VMEM((acc_rows, H), jnp.float32)]  # weighted-M partials

    def build(use_buffered):
        w_specs = []
        for w in weights:
            if use_buffered:
                # constant block index -> single-buffer the weights (saves VMEM)
                w_specs.append(pl.BlockSpec(w.shape, w_map,
                                            pipeline_mode=pl.Buffered(1)))
            else:
                w_specs.append(pl.BlockSpec(w.shape, w_map))
        in_specs = [pl.BlockSpec((1, Nt, F), h_map)] + w_specs
        return pl.pallas_call(
            kernel,
            out_shape=out_shape,
            grid_spec=pltpu.PrefetchScalarGridSpec(
                num_scalar_prefetch=0,
                grid=(B, K),
                in_specs=in_specs,
                out_specs=out_specs,
                scratch_shapes=scratch_shapes),
            compiler_params=pltpu.CompilerParams(
                dimension_semantics=("parallel", "arbitrary"),
                vmem_limit_bytes=vmem_limit),
        )

    try:
        logits3, M3 = build(True)(h_bf, *weights)
    except Exception:
        # pl.Buffered(1) not supported by this jax build -> default pipelining depth.
        logits3, M3 = build(False)(h_bf, *weights)

    logits = logits3[:, 0, :]
    M = M3[:, 0, :]
    Y_prob = jax.nn.softmax(logits, axis=1)
    Y_hat = jnp.argmax(logits, axis=1)[:, None]    # torch.topk(logits, 1)[1]
    return logits, Y_prob, Y_hat, M


# ----------------------- pure-JAX reference (sanity) --------------------------
def clam_ref(h, p):
    """Mirrors the kernel's mixed precision (bf16 matmul operands, f32 acc)."""
    B, N, _ = h.shape
    hp = jax.lax.Precision.HIGHEST
    x = h.astype(jnp.bfloat16).reshape(B * N, -1)
    h1 = jax.nn.relu(jnp.dot(x, p["w1"].astype(jnp.bfloat16),
                             preferred_element_type=jnp.float32) + p["b1"])
    h1b = h1.astype(jnp.bfloat16)
    a = jnp.tanh(jnp.dot(h1b, p["wa"].astype(jnp.bfloat16),
                         preferred_element_type=jnp.float32) + p["ba"])
    g = jax.nn.sigmoid(jnp.dot(h1b, p["wb"].astype(jnp.bfloat16),
                               preferred_element_type=jnp.float32) + p["bb"])
    A = jnp.dot(a * g, p["wc"], precision=hp,
                preferred_element_type=jnp.float32) + p["bc"]       # (B*N, 1)
    A = A.reshape(B, N)[:, None, :]                                 # b d n, d = 1
    A = jax.nn.softmax(A, axis=-1)
    h1r = h1.reshape(B, N, -1)
    M = jnp.einsum("bdn,bnh->bh", A, h1r, precision=hp)
    mu = M.mean(-1, keepdims=True)
    var = ((M - mu) ** 2).mean(-1, keepdims=True)
    Mn = (M - mu) / jnp.sqrt(var + 1e-5) * p["ln_g"] + p["ln_b"]
    z = jax.nn.sigmoid(jnp.dot(Mn, p["w2"], precision=hp,
                               preferred_element_type=jnp.float32) + p["b2"])
    logits = jnp.dot(z, p["w3"], precision=hp,
                     preferred_element_type=jnp.float32) + p["b3"]
    return logits, M


# --------------------------- parameter init -----------------------------------
def xavier_normal(key, fan_in, fan_out):
    std = (2.0 / (fan_in + fan_out)) ** 0.5
    return std * jax.random.normal(key, (fan_in, fan_out), dtype=jnp.float32)


def init_params(key, F, H, D, C1, n_classes):
    keys = jax.random.split(key, 6)
    return {
        # attention_net fc
        "w1": xavier_normal(keys[0], F, H), "b1": jnp.zeros((1, H), jnp.float32),
        # Attn_Net_Gated
        "wa": xavier_normal(keys[1], H, D), "ba": jnp.zeros((1, D), jnp.float32),
        "wb": xavier_normal(keys[2], H, D), "bb": jnp.zeros((1, D), jnp.float32),
        "wc": xavier_normal(keys[3], D, 1), "bc": jnp.zeros((1, 1), jnp.float32),
        # classifiers
        "ln_g": jnp.ones((1, H), jnp.float32), "ln_b": jnp.zeros((1, H), jnp.float32),
        "w2": xavier_normal(keys[4], H, C1), "b2": jnp.zeros((1, C1), jnp.float32),
        "w3": xavier_normal(keys[5], C1, n_classes),
        "b3": jnp.zeros((1, n_classes), jnp.float32),
    }


if __name__ == "__main__":
    # small shapes consistent with the module (feat_dim, hidden_feat, attn-D,
    # classifier hidden scaled down from 768/256/256/128)
    B, N, F, H, D, C1, NCLS = 2, 8, 64, 32, 32, 16, 2

    key = jax.random.PRNGKey(0)
    kh, kp, kh2 = jax.random.split(key, 3)
    params = init_params(kp, F, H, D, C1, NCLS)

    # case 1: single-tile bag
    h = jax.random.normal(kh, (B, N, F), dtype=jnp.float32)
    logits, Y_prob, Y_hat, M = clam_forward(h, params)
    jax.block_until_ready((logits, Y_prob, Y_hat, M))
    ref_logits, ref_M = clam_ref(h, params)
    d1 = float(jnp.max(jnp.abs(logits - ref_logits)))
    d2 = float(jnp.max(jnp.abs(M - ref_M)))

    # case 2: multi-tile bag with a ragged tail (exercises online softmax + mask)
    N2 = 40
    h2 = jax.random.normal(kh2, (B, N2, F), dtype=jnp.float32)
    logits2, _, _, M2 = clam_forward(h2, params, max_tile_rows=16)
    jax.block_until_ready((logits2, M2))
    ref_logits2, ref_M2 = clam_ref(h2, params)
    d3 = float(jnp.max(jnp.abs(logits2 - ref_logits2)))
    d4 = float(jnp.max(jnp.abs(M2 - ref_M2)))

    # non-fatal numerical sanity check against the mixed-precision reference
    if max(d1, d2, d3, d4) > 1e-2:
        print(f"WARNING: max diffs logits/M = {d1:.2e}/{d2:.2e}, "
              f"tiled logits/M = {d3:.2e}/{d4:.2e}")

    print("KERNEL_OK")
</pallas_src>

<mosaic_0001>
module attributes {stable_mosaic.version = 11 : i64} {
  func.func @kernel(%arg0: i32, %arg1: i32, %arg2: memref<1x8x64xbf16, #tpu.memory_space<vmem>>, %arg3: memref<64x32xbf16, #tpu.memory_space<vmem>>, %arg4: memref<1x32xf32, #tpu.memory_space<vmem>>, %arg5: memref<32x64xbf16, #tpu.memory_space<vmem>>, %arg6: memref<1x64xf32, #tpu.memory_space<vmem>>, %arg7: memref<1x32xf32, #tpu.memory_space<vmem>>, %arg8: memref<1x1xf32, #tpu.memory_space<vmem>>, %arg9: memref<1x32xf32, #tpu.memory_space<vmem>>, %arg10: memref<1x32xf32, #tpu.memory_space<vmem>>, %arg11: memref<32x16xf32, #tpu.memory_space<vmem>>, %arg12: memref<1x16xf32, #tpu.memory_space<vmem>>, %arg13: memref<16x2xf32, #tpu.memory_space<vmem>>, %arg14: memref<1x2xf32, #tpu.memory_space<vmem>>, %arg15: memref<1x1x2xf32, #tpu.memory_space<vmem>>, %arg16: memref<1x1x32xf32, #tpu.memory_space<vmem>>, %arg17: memref<1x1xf32, #tpu.memory_space<vmem>>, %arg18: memref<1x1xf32, #tpu.memory_space<vmem>>, %arg19: memref<8x32xf32, #tpu.memory_space<vmem>>) attributes {dimension_semantics = [#tpu.dimension_semantics<parallel>, #tpu.dimension_semantics<arbitrary>], iteration_bounds = array<i64: 2, 1>, scalar_prefetch = 0 : i64, scratch_operands = 3 : i64, tpu.core_type = #tpu.core_type<tc>, window_params = [{transform_indices = @transform_0, window_bounds = array<i64: 1, 8, 64>}, {pipeline_mode = #tpu.pipeline_mode<synchronous>, transform_indices = @transform_1, window_bounds = array<i64: 64, 32>}, {pipeline_mode = #tpu.pipeline_mode<synchronous>, transform_indices = @transform_2, window_bounds = array<i64: 1, 32>}, {pipeline_mode = #tpu.pipeline_mode<synchronous>, transform_indices = @transform_3, window_bounds = array<i64: 32, 64>}, {pipeline_mode = #tpu.pipeline_mode<synchronous>, transform_indices = @transform_4, window_bounds = array<i64: 1, 64>}, {pipeline_mode = #tpu.pipeline_mode<synchronous>, transform_indices = @transform_5, window_bounds = array<i64: 1, 32>}, {pipeline_mode = #tpu.pipeline_mode<synchronous>, transform_indices = @transform_6, window_bounds = array<i64: 1, 1>}, {pipeline_mode = #tpu.pipeline_mode<synchronous>, transform_indices = @transform_7, window_bounds = array<i64: 1, 32>}, {pipeline_mode = #tpu.pipeline_mode<synchronous>, transform_indices = @transform_8, window_bounds = array<i64: 1, 32>}, {pipeline_mode = #tpu.pipeline_mode<synchronous>, transform_indices = @transform_9, window_bounds = array<i64: 32, 16>}, {pipeline_mode = #tpu.pipeline_mode<synchronous>, transform_indices = @transform_10, window_bounds = array<i64: 1, 16>}, {pipeline_mode = #tpu.pipeline_mode<synchronous>, transform_indices = @transform_11, window_bounds = array<i64: 16, 2>}, {pipeline_mode = #tpu.pipeline_mode<synchronous>, transform_indices = @transform_12, window_bounds = array<i64: 1, 2>}, {transform_indices = @transform_13, window_bounds = array<i64: 1, 1, 2>}, {transform_indices = @transform_14, window_bounds = array<i64: 1, 1, 32>}]} {
    %c0_i32 = arith.constant 0 : i32
    %0 = arith.cmpi eq, %arg1, %c0_i32 : i32
    %1 = arith.extui %0 : i1 to i32
    %c0_i32_0 = arith.constant 0 : i32
    %2 = arith.cmpi ne, %1, %c0_i32_0 : i32
    scf.if %2 {
      %cst_36 = arith.constant 0xFF800000 : f32
      %63 = vector.broadcast %cst_36 : f32 to vector<1x1xf32>
      %c0_37 = arith.constant 0 : index
      %c0_38 = arith.constant 0 : index
      %64 = vector.load %arg17[%c0_37, %c0_38] : memref<1x1xf32, #tpu.memory_space<vmem>>, vector<1x1xf32>
      tpu.vector_store %arg17[%c0_37, %c0_38], %63 {strides = array<i32>} : memref<1x1xf32, #tpu.memory_space<vmem>>, vector<1x1xf32>,
      %cst_39 = arith.constant 0.000000e+00 : f32
      %65 = vector.broadcast %cst_39 : f32 to vector<1x1xf32>
      %c0_40 = arith.constant 0 : index
      %c0_41 = arith.constant 0 : index
      %66 = vector.load %arg18[%c0_40, %c0_41] : memref<1x1xf32, #tpu.memory_space<vmem>>, vector<1x1xf32>
      tpu.vector_store %arg18[%c0_40, %c0_41], %65 {strides = array<i32>} : memref<1x1xf32, #tpu.memory_space<vmem>>, vector<1x1xf32>,
      %cst_42 = arith.constant 0.000000e+00 : f32
      %67 = vector.broadcast %cst_42 : f32 to vector<8x32xf32>
      %c0_43 = arith.constant 0 : index
      %c0_44 = arith.constant 0 : index
      %68 = vector.load %arg19[%c0_43, %c0_44] : memref<8x32xf32, #tpu.memory_space<vmem>>, vector<8x32xf32>
      tpu.vector_store %arg19[%c0_43, %c0_44], %67 {strides = array<i32>} : memref<8x32xf32, #tpu.memory_space<vmem>>, vector<8x32xf32>,
    } else {
    }
    %c0 = arith.constant 0 : index
    %c0_1 = arith.constant 0 : index
    %c0_2 = arith.constant 0 : index
    %3 = vector.load %arg2[%c0, %c0_1, %c0_2] : memref<1x8x64xbf16, #tpu.memory_space<vmem>>, vector<1x8x64xbf16>
    %4 = vector.shape_cast %3 : vector<1x8x64xbf16> to vector<8x64xbf16>
    %c0_3 = arith.constant 0 : index
    %c0_4 = arith.constant 0 : index
    %5 = vector.load %arg3[%c0_3, %c0_4] : memref<64x32xbf16, #tpu.memory_space<vmem>>, vector<64x32xbf16>
    %cst = arith.constant dense<0.000000e+00> : vector<8x32xf32>
    %6 = tpu.matmul %4, %5, %cst {dimension_numbers = #tpu.dot_dimension_numbers<[1], [0], [0], [1], [0, 0, 1, 1], [], []>} : vector<8x64xbf16>, vector<64x32xbf16>, vector<8x32xf32> -> vector<8x32xf32>
    %c0_5 = arith.constant 0 : index
    %c0_6 = arith.constant 0 : index
    %7 = vector.load %arg4[%c0_5, %c0_6] : memref<1x32xf32, #tpu.memory_space<vmem>>, vector<1x32xf32>
    %8 = vector.broadcast %7 : vector<1x32xf32> to vector<8x32xf32>
    %9 = arith.addf %6, %8 : vector<8x32xf32>
    %cst_7 = arith.constant 0.000000e+00 : f32
    %10 = vector.broadcast %cst_7 : f32 to vector<8x32xf32>
    %11 = arith.maximumf %9, %10 : vector<8x32xf32>
    %12 = arith.truncf %11 : vector<8x32xf32> to vector<8x32xbf16>
    %c0_8 = arith.constant 0 : index
    %c0_9 = arith.constant 0 : index
    %13 = vector.load %arg5[%c0_8, %c0_9] : memref<32x64xbf16, #tpu.memory_space<vmem>>, vector<32x64xbf16>
    %cst_10 = arith.constant dense<0.000000e+00> : vector<8x64xf32>
    %14 = tpu.matmul %12, %13, %cst_10 {dimension_numbers = #tpu.dot_dimension_numbers<[1], [0], [0], [1], [0, 0, 1, 1], [], []>} : vector<8x32xbf16>, vector<32x64xbf16>, vector<8x64xf32> -> vector<8x64xf32>
    %c0_11 = arith.constant 0 : index
    %c0_12 = arith.constant 0 : index
    %15 = vector.load %arg6[%c0_11, %c0_12] : memref<1x64xf32, #tpu.memory_space<vmem>>, vector<1x64xf32>
    %16 = vector.broadcast %15 : vector<1x64xf32> to vector<8x64xf32>
    %17 = arith.addf %14, %16 : vector<8x64xf32>
    %18 = vector.extract_strided_slice %17 {offsets = [0, 0], sizes = [8, 32], strides = [1, 1]} : vector<8x64xf32> to vector<8x32xf32>
    %19 = math.tanh %18 : vector<8x32xf32>
    %20 = vector.extract_strided_slice %17 {offsets = [0, 32], sizes = [8, 32], strides = [1, 1]} : vector<8x64xf32> to vector<8x32xf32>
    %21 = arith.negf %20 : vector<8x32xf32>
    %22 = math.exp %21 : vector<8x32xf32>
    %cst_13 = arith.constant 1.000000e+00 : f32
    %23 = vector.broadcast %cst_13 : f32 to vector<8x32xf32>
    %24 = arith.addf %23, %22 : vector<8x32xf32>
    %25 = arith.divf %23, %24 : vector<8x32xf32>
    %26 = arith.mulf %19, %25 : vector<8x32xf32>
    %c0_14 = arith.constant 0 : index
    %c0_15 = arith.constant 0 : index
    %27 = vector.load %arg7[%c0_14, %c0_15] : memref<1x32xf32, #tpu.memory_space<vmem>>, vector<1x32xf32>
    %28 = vector.broadcast %27 : vector<1x32xf32> to vector<8x32xf32>
    %29 = arith.mulf %26, %28 : vector<8x32xf32>
    %cst_16 = arith.constant dense<0.000000e+00> : vector<8xf32>
    %30 = vector.multi_reduction <add>, %29, %cst_16 [1] : vector<8x32xf32> to vector<8xf32>
    %31 = vector.shape_cast %30 : vector<8xf32> to vector<8x1xf32>
    %c0_17 = arith.constant 0 : index
    %c0_18 = arith.constant 0 : index
    %32 = vector.load %arg8[%c0_17, %c0_18] : memref<1x1xf32, #tpu.memory_space<vmem>>, vector<1x1xf32>
    %33 = vector.broadcast %32 : vector<1x1xf32> to vector<8x1xf32>
    %34 = arith.addf %31, %33 : vector<8x1xf32>
    %c0_19 = arith.constant 0 : index
    %c0_20 = arith.constant 0 : index
    %35 = vector.load %arg17[%c0_19, %c0_20] : memref<1x1xf32, #tpu.memory_space<vmem>>, vector<1x1xf32>
    %cst_21 = arith.constant dense<0xFF800000> : vector<1xf32>
    %36 = vector.multi_reduction <maximumf>, %34, %cst_21 [0] : vector<8x1xf32> to vector<1xf32>
    %37 = vector.shape_cast %36 : vector<1xf32> to vector<1x1xf32>
    %38 = arith.maximumf %35, %37 : vector<1x1xf32>
    %39 = arith.subf %35, %38 : vector<1x1xf32>
    %40 = math.exp %39 : vector<1x1xf32>
    %41 = vector.broadcast %38 : vector<1x1xf32> to vector<8x1xf32>
    %42 = arith.subf %34, %41 : vector<8x1xf32>
    %43 = math.exp %42 : vector<8x1xf32>
    %c0_22 = arith.constant 0 : index
    %c0_23 = arith.constant 0 : index
    %44 = vector.load %arg18[%c0_22, %c0_23] : memref<1x1xf32, #tpu.memory_space<vmem>>, vector<1x1xf32>
    %45 = arith.mulf %40, %44 : vector<1x1xf32>
    %cst_24 = arith.constant dense<0.000000e+00> : vector<1xf32>
    %46 = vector.multi_reduction <add>, %43, %cst_24 [0] : vector<8x1xf32> to vector<1xf32>
    %47 = vector.shape_cast %46 : vector<1xf32> to vector<1x1xf32>
    %48 = arith.addf %45, %47 : vector<1x1xf32>
    %c0_25 = arith.constant 0 : index
    %c0_26 = arith.constant 0 : index
    %49 = vector.load %arg18[%c0_25, %c0_26] : memref<1x1xf32, #tpu.memory_space<vmem>>, vector<1x1xf32>
    tpu.vector_store %arg18[%c0_25, %c0_26], %48 {strides = array<i32>} : memref<1x1xf32, #tpu.memory_space<vmem>>, vector<1x1xf32>,
    %50 = vector.broadcast %43 : vector<8x1xf32> to vector<8x32xf32>
    %51 = arith.mulf %50, %11 : vector<8x32xf32>
    %52 = vector.shape_cast %51 : vector<8x32xf32> to vector<1x8x32xf32>
    %cst_27 = arith.constant dense<0.000000e+00> : vector<8x32xf32>
    %53 = vector.multi_reduction <add>, %52, %cst_27 [0] : vector<1x8x32xf32> to vector<8x32xf32>
    %c0_28 = arith.constant 0 : index
    %c0_29 = arith.constant 0 : index
    %54 = vector.load %arg19[%c0_28, %c0_29] : memref<8x32xf32, #tpu.memory_space<vmem>>, vector<8x32xf32>
    %55 = vector.broadcast %40 : vector<1x1xf32> to vector<8x32xf32>
    %56 = arith.mulf %55, %54 : vector<8x32xf32>
    %57 = arith.addf %56, %53 : vector<8x32xf32>
    %c0_30 = arith.constant 0 : index
    %c0_31 = arith.constant 0 : index
    %58 = vector.load %arg19[%c0_30, %c0_31] : memref<8x32xf32, #tpu.memory_space<vmem>>, vector<8x32xf32>
    tpu.vector_store %arg19[%c0_30, %c0_31], %57 {strides = array<i32>} : memref<8x32xf32, #tpu.memory_space<vmem>>, vector<8x32xf32>,
    %c0_32 = arith.constant 0 : index
    %c0_33 = arith.constant 0 : index
    %59 = vector.load %arg17[%c0_32, %c0_33] : memref<1x1xf32, #tpu.memory_space<vmem>>, vector<1x1xf32>
    tpu.vector_store %arg17[%c0_32, %c0_33], %38 {strides = array<i32>} : memref<1x1xf32, #tpu.memory_space<vmem>>, vector<1x1xf32>,
    %c0_i32_34 = arith.constant 0 : i32
    %60 = arith.cmpi eq, %arg1, %c0_i32_34 : i32
    %61 = arith.extui %60 : i1 to i32
    %c0_i32_35 = arith.constant 0 : i32
    %62 = arith.cmpi ne, %61, %c0_i32_35 : i32
    scf.if %62 {
      %c0_36 = arith.constant 0 : index
      %c0_37 = arith.constant 0 : index
      %63 = vector.load %arg19[%c0_36, %c0_37] : memref<8x32xf32, #tpu.memory_space<vmem>>, vector<8x32xf32>
      %cst_38 = arith.constant dense<0.000000e+00> : vector<32xf32>
      %64 = vector.multi_reduction <add>, %63, %cst_38 [0] : vector<8x32xf32> to vector<32xf32>
      %65 = vector.shape_cast %64 : vector<32xf32> to vector<1x32xf32>
      %c0_39 = arith.constant 0 : index
      %c0_40 = arith.constant 0 : index
      %66 = vector.load %arg18[%c0_39, %c0_40] : memref<1x1xf32, #tpu.memory_space<vmem>>, vector<1x1xf32>
      %67 = vector.broadcast %66 : vector<1x1xf32> to vector<1x32xf32>
      %68 = arith.divf %65, %67 : vector<1x32xf32>
      %cst_41 = arith.constant dense<0.000000e+00> : vector<1xf32>
      %69 = vector.multi_reduction <add>, %68, %cst_41 [1] : vector<1x32xf32> to vector<1xf32>
      %70 = vector.shape_cast %69 : vector<1xf32> to vector<1x1xf32>
      %cst_42 = arith.constant 3.200000e+01 : f32
      %71 = vector.broadcast %cst_42 : f32 to vector<1x1xf32>
      %72 = arith.divf %70, %71 : vector<1x1xf32>
      %73 = vector.broadcast %72 : vector<1x1xf32> to vector<1x32xf32>
      %74 = arith.subf %68, %73 : vector<1x32xf32>
      %75 = arith.mulf %74, %74 : vector<1x32xf32>
      %cst_43 = arith.constant dense<0.000000e+00> : vector<1xf32>
      %76 = vector.multi_reduction <add>, %75, %cst_43 [1] : vector<1x32xf32> to vector<1xf32>
      %77 = vector.shape_cast %76 : vector<1xf32> to vector<1x1xf32>
      %cst_44 = arith.constant 3.200000e+01 : f32
      %78 = vector.broadcast %cst_44 : f32 to vector<1x1xf32>
      %79 = arith.divf %77, %78 : vector<1x1xf32>
      %80 = vector.broadcast %72 : vector<1x1xf32> to vector<1x32xf32>
      %81 = arith.subf %68, %80 : vector<1x32xf32>
      %cst_45 = arith.constant 9.99999974E-6 : f32
      %82 = vector.broadcast %cst_45 : f32 to vector<1x1xf32>
      %83 = arith.addf %79, %82 : vector<1x1xf32>
      %84 = math.rsqrt %83 : vector<1x1xf32>
      %85 = vector.broadcast %84 : vector<1x1xf32> to vector<1x32xf32>
      %86 = arith.mulf %81, %85 : vector<1x32xf32>
      %c0_46 = arith.constant 0 : index
      %c0_47 = arith.constant 0 : index
      %87 = vector.load %arg9[%c0_46, %c0_47] : memref<1x32xf32, #tpu.memory_space<vmem>>, vector<1x32xf32>
      %88 = arith.mulf %86, %87 : vector<1x32xf32>
      %c0_48 = arith.constant 0 : index
      %c0_49 = arith.constant 0 : index
      %89 = vector.load %arg10[%c0_48, %c0_49] : memref<1x32xf32, #tpu.memory_space<vmem>>, vector<1x32xf32>
      %90 = arith.addf %88, %89 : vector<1x32xf32>
      %c0_50 = arith.constant 0 : index
      %c0_51 = arith.constant 0 : index
      %91 = vector.load %arg11[%c0_50, %c0_51] : memref<32x16xf32, #tpu.memory_space<vmem>>, vector<32x16xf32>
      %cst_52 = arith.constant dense<0.000000e+00> : vector<1x16xf32>
      %92 = tpu.matmul %90, %91, %cst_52 {dimension_numbers = #tpu.dot_dimension_numbers<[1], [0], [0], [1], [0, 0, 1, 1], [], []>} : vector<1x32xf32>, vector<32x16xf32>, vector<1x16xf32> -> vector<1x16xf32>
      %c0_53 = arith.constant 0 : index
      %c0_54 = arith.constant 0 : index
      %93 = vector.load %arg12[%c0_53, %c0_54] : memref<1x16xf32, #tpu.memory_space<vmem>>, vector<1x16xf32>
      %94 = arith.addf %92, %93 : vector<1x16xf32>
      %95 = arith.negf %94 : vector<1x16xf32>
      %96 = math.exp %95 : vector<1x16xf32>
      %cst_55 = arith.constant 1.000000e+00 : f32
      %97 = vector.broadcast %cst_55 : f32 to vector<1x16xf32>
      %98 = arith.addf %97, %96 : vector<1x16xf32>
      %99 = arith.divf %97, %98 : vector<1x16xf32>
      %c0_56 = arith.constant 0 : index
      %c0_57 = arith.constant 0 : index
      %100 = vector.load %arg13[%c0_56, %c0_57] : memref<16x2xf32, #tpu.memory_space<vmem>>, vector<16x2xf32>
      %cst_58 = arith.constant dense<0.000000e+00> : vector<1x2xf32>
      %101 = tpu.matmul %99, %100, %cst_58 {dimension_numbers = #tpu.dot_dimension_numbers<[1], [0], [0], [1], [0, 0, 1, 1], [], []>} : vector<1x16xf32>, vector<16x2xf32>, vector<1x2xf32> -> vector<1x2xf32>
      %c0_59 = arith.constant 0 : index
      %c0_60 = arith.constant 0 : index
      %102 = vector.load %arg14[%c0_59, %c0_60] : memref<1x2xf32, #tpu.memory_space<vmem>>, vector<1x2xf32>
      %103 = arith.addf %101, %102 : vector<1x2xf32>
      %104 = vector.shape_cast %103 : vector<1x2xf32> to vector<1x1x2xf32>
      %c0_61 = arith.constant 0 : index
      %c0_62 = arith.constant 0 : index
      %c0_63 = arith.constant 0 : index
      %105 = vector.load %arg15[%c0_61, %c0_62, %c0_63] : memref<1x1x2xf32, #tpu.memory_space<vmem>>, vector<1x1x2xf32>
      tpu.vector_store %arg15[%c0_61, %c0_62, %c0_63], %104 {strides = array<i32>} : memref<1x1x2xf32, #tpu.memory_space<vmem>>, vector<1x1x2xf32>,
      %106 = vector.shape_cast %68 : vector<1x32xf32> to vector<1x1x32xf32>
      %c0_64 = arith.constant 0 : index
      %c0_65 = arith.constant 0 : index
      %c0_66 = arith.constant 0 : index
      %107 = vector.load %arg16[%c0_64, %c0_65, %c0_66] : memref<1x1x32xf32, #tpu.memory_space<vmem>>, vector<1x1x32xf32>
      tpu.vector_store %arg16[%c0_64, %c0_65, %c0_66], %106 {strides = array<i32>} : memref<1x1x32xf32, #tpu.memory_space<vmem>>, vector<1x1x32xf32>,
    } else {
    }
    return
  }
  func.func @transform_0(%arg0: i32, %arg1: i32) -> (i32, i32, i32) {
    %c0_i32 = arith.constant 0 : i32
    %c0_i32_0 = arith.constant 0 : i32
    return %arg0, %arg1, %c0_i32 : i32, i32, i32
  }
  func.func @transform_1(%arg0: i32, %arg1: i32) -> (i32, i32) {
    %c0_i32 = arith.constant 0 : i32
    %c0_i32_0 = arith.constant 0 : i32
    %c0_i32_1 = arith.constant 0 : i32
    return %c0_i32, %c0_i32_0 : i32, i32
  }
  func.func @transform_2(%arg0: i32, %arg1: i32) -> (i32, i32) {
    %c0_i32 = arith.constant 0 : i32
    %c0_i32_0 = arith.constant 0 : i32
    %c0_i32_1 = arith.constant 0 : i32
    return %c0_i32, %c0_i32_0 : i32, i32
  }
  func.func @transform_3(%arg0: i32, %arg1: i32) -> (i32, i32) {
    %c0_i32 = arith.constant 0 : i32
    %c0_i32_0 = arith.constant 0 : i32
    %c0_i32_1 = arith.constant 0 : i32
    return %c0_i32, %c0_i32_0 : i32, i32
  }
  func.func @transform_4(%arg0: i32, %arg1: i32) -> (i32, i32) {
    %c0_i32 = arith.constant 0 : i32
    %c0_i32_0 = arith.constant 0 : i32
    %c0_i32_1 = arith.constant 0 : i32
    return %c0_i32, %c0_i32_0 : i32, i32
  }
  func.func @transform_5(%arg0: i32, %arg1: i32) -> (i32, i32) {
    %c0_i32 = arith.constant 0 : i32
    %c0_i32_0 = arith.constant 0 : i32
    %c0_i32_1 = arith.constant 0 : i32
    return %c0_i32, %c0_i32_0 : i32, i32
  }
  func.func @transform_6(%arg0: i32, %arg1: i32) -> (i32, i32) {
    %c0_i32 = arith.constant 0 : i32
    %c0_i32_0 = arith.constant 0 : i32
    %c0_i32_1 = arith.constant 0 : i32
    return %c0_i32, %c0_i32_0 : i32, i32
  }
  func.func @transform_7(%arg0: i32, %arg1: i32) -> (i32, i32) {
    %c0_i32 = arith.constant 0 : i32
    %c0_i32_0 = arith.constant 0 : i32
    %c0_i32_1 = arith.constant 0 : i32
    return %c0_i32, %c0_i32_0 : i32, i32
  }
  func.func @transform_8(%arg0: i32, %arg1: i32) -> (i32, i32) {
    %c0_i32 = arith.constant 0 : i32
    %c0_i32_0 = arith.constant 0 : i32
    %c0_i32_1 = arith.constant 0 : i32
    return %c0_i32, %c0_i32_0 : i32, i32
  }
  func.func @transform_9(%arg0: i32, %arg1: i32) -> (i32, i32) {
    %c0_i32 = arith.constant 0 : i32
    %c0_i32_0 = arith.constant 0 : i32
    %c0_i32_1 = arith.constant 0 : i32
    return %c0_i32, %c0_i32_0 : i32, i32
  }
  func.func @transform_10(%arg0: i32, %arg1: i32) -> (i32, i32) {
    %c0_i32 = arith.constant 0 : i32
    %c0_i32_0 = arith.constant 0 : i32
    %c0_i32_1 = arith.constant 0 : i32
    return %c0_i32, %c0_i32_0 : i32, i32
  }
  func.func @transform_11(%arg0: i32, %arg1: i32) -> (i32, i32) {
    %c0_i32 = arith.constant 0 : i32
    %c0_i32_0 = arith.constant 0 : i32
    %c0_i32_1 = arith.constant 0 : i32
    return %c0_i32, %c0_i32_0 : i32, i32
  }
  func.func @transform_12(%arg0: i32, %arg1: i32) -> (i32, i32) {
    %c0_i32 = arith.constant 0 : i32
    %c0_i32_0 = arith.constant 0 : i32
    %c0_i32_1 = arith.constant 0 : i32
    return %c0_i32, %c0_i32_0 : i32, i32
  }
  func.func @transform_13(%arg0: i32, %arg1: i32) -> (i32, i32, i32) {
    %c0_i32 = arith.constant 0 : i32
    %c0_i32_0 = arith.constant 0 : i32
    %c0_i32_1 = arith.constant 0 : i32
    return %arg0, %c0_i32, %c0_i32_0 : i32, i32, i32
  }
  func.func @transform_14(%arg0: i32, %arg1: i32) -> (i32, i32, i32) {
    %c0_i32 = arith.constant 0 : i32
    %c0_i32_0 = arith.constant 0 : i32
    %c0_i32_1 = arith.constant 0 : i32
    return %arg0, %c0_i32, %c0_i32_0 : i32, i32, i32
  }
}

module attributes {stable_mosaic.version = 11 : i64} {
  func.func @kernel(%arg0: i32, %arg1: i32, %arg2: memref<1x8x64xbf16, #tpu.memory_space<vmem>>, %arg3: memref<64x32xbf16, #tpu.memory_space<vmem>>, %arg4: memref<1x32xf32, #tpu.memory_space<vmem>>, %arg5: memref<32x64xbf16, #tpu.memory_space<vmem>>, %arg6: memref<1x64xf32, #tpu.memory_space<vmem>>, %arg7: memref<1x32xf32, #tpu.memory_space<vmem>>, %arg8: memref<1x1xf32, #tpu.memory_space<vmem>>, %arg9: memref<1x32xf32, #tpu.memory_space<vmem>>, %arg10: memref<1x32xf32, #tpu.memory_space<vmem>>, %arg11: memref<32x16xf32, #tpu.memory_space<vmem>>, %arg12: memref<1x16xf32, #tpu.memory_space<vmem>>, %arg13: memref<16x2xf32, #tpu.memory_space<vmem>>, %arg14: memref<1x2xf32, #tpu.memory_space<vmem>>, %arg15: memref<1x1x2xf32, #tpu.memory_space<vmem>>, %arg16: memref<1x1x32xf32, #tpu.memory_space<vmem>>, %arg17: memref<1x1xf32, #tpu.memory_space<vmem>>, %arg18: memref<1x1xf32, #tpu.memory_space<vmem>>, %arg19: memref<8x32xf32, #tpu.memory_space<vmem>>) attributes {dimension_semantics = [#tpu.dimension_semantics<parallel>, #tpu.dimension_semantics<arbitrary>], iteration_bounds = array<i64: 2, 1>, scalar_prefetch = 0 : i64, scratch_operands = 3 : i64, tpu.core_type = #tpu.core_type<tc>, window_params = [{transform_indices = @transform_0, window_bounds = array<i64: 1, 8, 64>}, {pipeline_mode = #tpu.pipeline_mode<synchronous>, transform_indices = @transform_1, window_bounds = array<i64: 64, 32>}, {pipeline_mode = #tpu.pipeline_mode<synchronous>, transform_indices = @transform_2, window_bounds = array<i64: 1, 32>}, {pipeline_mode = #tpu.pipeline_mode<synchronous>, transform_indices = @transform_3, window_bounds = array<i64: 32, 64>}, {pipeline_mode = #tpu.pipeline_mode<synchronous>, transform_indices = @transform_4, window_bounds = array<i64: 1, 64>}, {pipeline_mode = #tpu.pipeline_mode<synchronous>, transform_indices = @transform_5, window_bounds = array<i64: 1, 32>}, {pipeline_mode = #tpu.pipeline_mode<synchronous>, transform_indices = @transform_6, window_bounds = array<i64: 1, 1>}, {pipeline_mode = #tpu.pipeline_mode<synchronous>, transform_indices = @transform_7, window_bounds = array<i64: 1, 32>}, {pipeline_mode = #tpu.pipeline_mode<synchronous>, transform_indices = @transform_8, window_bounds = array<i64: 1, 32>}, {pipeline_mode = #tpu.pipeline_mode<synchronous>, transform_indices = @transform_9, window_bounds = array<i64: 32, 16>}, {pipeline_mode = #tpu.pipeline_mode<synchronous>, transform_indices = @transform_10, window_bounds = array<i64: 1, 16>}, {pipeline_mode = #tpu.pipeline_mode<synchronous>, transform_indices = @transform_11, window_bounds = array<i64: 16, 2>}, {pipeline_mode = #tpu.pipeline_mode<synchronous>, transform_indices = @transform_12, window_bounds = array<i64: 1, 2>}, {transform_indices = @transform_13, window_bounds = array<i64: 1, 1, 2>}, {transform_indices = @transform_14, window_bounds = array<i64: 1, 1, 32>}]} {
    %c0_i32 = arith.constant 0 : i32
    %0 = arith.cmpi eq, %arg1, %c0_i32 : i32
    %1 = arith.extui %0 : i1 to i32
    %c0_i32_0 = arith.constant 0 : i32
    %2 = arith.cmpi ne, %1, %c0_i32_0 : i32
    scf.if %2 {
      %cst_36 = arith.constant 0xFF800000 : f32
      %63 = vector.broadcast %cst_36 : f32 to vector<1x1xf32>
      %c0_37 = arith.constant 0 : index
      %c0_38 = arith.constant 0 : index
      %64 = vector.load %arg17[%c0_37, %c0_38] : memref<1x1xf32, #tpu.memory_space<vmem>>, vector<1x1xf32>
      tpu.vector_store %arg17[%c0_37, %c0_38], %63 {strides = array<i32>} : memref<1x1xf32, #tpu.memory_space<vmem>>, vector<1x1xf32>,
      %cst_39 = arith.constant 0.000000e+00 : f32
      %65 = vector.broadcast %cst_39 : f32 to vector<1x1xf32>
      %c0_40 = arith.constant 0 : index
      %c0_41 = arith.constant 0 : index
      %66 = vector.load %arg18[%c0_40, %c0_41] : memref<1x1xf32, #tpu.memory_space<vmem>>, vector<1x1xf32>
      tpu.vector_store %arg18[%c0_40, %c0_41], %65 {strides = array<i32>} : memref<1x1xf32, #tpu.memory_space<vmem>>, vector<1x1xf32>,
      %cst_42 = arith.constant 0.000000e+00 : f32
      %67 = vector.broadcast %cst_42 : f32 to vector<8x32xf32>
      %c0_43 = arith.constant 0 : index
      %c0_44 = arith.constant 0 : index
      %68 = vector.load %arg19[%c0_43, %c0_44] : memref<8x32xf32, #tpu.memory_space<vmem>>, vector<8x32xf32>
      tpu.vector_store %arg19[%c0_43, %c0_44], %67 {strides = array<i32>} : memref<8x32xf32, #tpu.memory_space<vmem>>, vector<8x32xf32>,
    } else {
    }
    %c0 = arith.constant 0 : index
    %c0_1 = arith.constant 0 : index
    %c0_2 = arith.constant 0 : index
    %3 = vector.load %arg2[%c0, %c0_1, %c0_2] : memref<1x8x64xbf16, #tpu.memory_space<vmem>>, vector<1x8x64xbf16>
    %4 = vector.shape_cast %3 : vector<1x8x64xbf16> to vector<8x64xbf16>
    %c0_3 = arith.constant 0 : index
    %c0_4 = arith.constant 0 : index
    %5 = vector.load %arg3[%c0_3, %c0_4] : memref<64x32xbf16, #tpu.memory_space<vmem>>, vector<64x32xbf16>
    %cst = arith.constant dense<0.000000e+00> : vector<8x32xf32>
    %6 = tpu.matmul %4, %5, %cst {dimension_numbers = #tpu.dot_dimension_numbers<[1], [0], [0], [1], [0, 0, 1, 1], [], []>} : vector<8x64xbf16>, vector<64x32xbf16>, vector<8x32xf32> -> vector<8x32xf32>
    %c0_5 = arith.constant 0 : index
    %c0_6 = arith.constant 0 : index
    %7 = vector.load %arg4[%c0_5, %c0_6] : memref<1x32xf32, #tpu.memory_space<vmem>>, vector<1x32xf32>
    %8 = vector.broadcast %7 : vector<1x32xf32> to vector<8x32xf32>
    %9 = arith.addf %6, %8 : vector<8x32xf32>
    %cst_7 = arith.constant 0.000000e+00 : f32
    %10 = vector.broadcast %cst_7 : f32 to vector<8x32xf32>
    %11 = arith.maximumf %9, %10 : vector<8x32xf32>
    %12 = arith.truncf %11 : vector<8x32xf32> to vector<8x32xbf16>
    %c0_8 = arith.constant 0 : index
    %c0_9 = arith.constant 0 : index
    %13 = vector.load %arg5[%c0_8, %c0_9] : memref<32x64xbf16, #tpu.memory_space<vmem>>, vector<32x64xbf16>
    %cst_10 = arith.constant dense<0.000000e+00> : vector<8x64xf32>
    %14 = tpu.matmul %12, %13, %cst_10 {dimension_numbers = #tpu.dot_dimension_numbers<[1], [0], [0], [1], [0, 0, 1, 1], [], []>} : vector<8x32xbf16>, vector<32x64xbf16>, vector<8x64xf32> -> vector<8x64xf32>
    %c0_11 = arith.constant 0 : index
    %c0_12 = arith.constant 0 : index
    %15 = vector.load %arg6[%c0_11, %c0_12] : memref<1x64xf32, #tpu.memory_space<vmem>>, vector<1x64xf32>
    %16 = vector.broadcast %15 : vector<1x64xf32> to vector<8x64xf32>
    %17 = arith.addf %14, %16 : vector<8x64xf32>
    %18 = vector.extract_strided_slice %17 {offsets = [0, 0], sizes = [8, 32], strides = [1, 1]} : vector<8x64xf32> to vector<8x32xf32>
    %19 = math.tanh %18 : vector<8x32xf32>
    %20 = vector.extract_strided_slice %17 {offsets = [0, 32], sizes = [8, 32], strides = [1, 1]} : vector<8x64xf32> to vector<8x32xf32>
    %21 = arith.negf %20 : vector<8x32xf32>
    %22 = math.exp %21 : vector<8x32xf32>
    %cst_13 = arith.constant 1.000000e+00 : f32
    %23 = vector.broadcast %cst_13 : f32 to vector<8x32xf32>
    %24 = arith.addf %23, %22 : vector<8x32xf32>
    %25 = arith.divf %23, %24 : vector<8x32xf32>
    %26 = arith.mulf %19, %25 : vector<8x32xf32>
    %c0_14 = arith.constant 0 : index
    %c0_15 = arith.constant 0 : index
    %27 = vector.load %arg7[%c0_14, %c0_15] : memref<1x32xf32, #tpu.memory_space<vmem>>, vector<1x32xf32>
    %28 = vector.broadcast %27 : vector<1x32xf32> to vector<8x32xf32>
    %29 = arith.mulf %26, %28 : vector<8x32xf32>
    %cst_16 = arith.constant dense<0.000000e+00> : vector<8xf32>
    %30 = vector.multi_reduction <add>, %29, %cst_16 [1] : vector<8x32xf32> to vector<8xf32>
    %31 = vector.shape_cast %30 : vector<8xf32> to vector<8x1xf32>
    %c0_17 = arith.constant 0 : index
    %c0_18 = arith.constant 0 : index
    %32 = vector.load %arg8[%c0_17, %c0_18] : memref<1x1xf32, #tpu.memory_space<vmem>>, vector<1x1xf32>
    %33 = vector.broadcast %32 : vector<1x1xf32> to vector<8x1xf32>
    %34 = arith.addf %31, %33 : vector<8x1xf32>
    %c0_19 = arith.constant 0 : index
    %c0_20 = arith.constant 0 : index
    %35 = vector.load %arg17[%c0_19, %c0_20] : memref<1x1xf32, #tpu.memory_space<vmem>>, vector<1x1xf32>
    %cst_21 = arith.constant dense<0xFF800000> : vector<1xf32>
    %36 = vector.multi_reduction <maximumf>, %34, %cst_21 [0] : vector<8x1xf32> to vector<1xf32>
    %37 = vector.shape_cast %36 : vector<1xf32> to vector<1x1xf32>
    %38 = arith.maximumf %35, %37 : vector<1x1xf32>
    %39 = arith.subf %35, %38 : vector<1x1xf32>
    %40 = math.exp %39 : vector<1x1xf32>
    %41 = vector.broadcast %38 : vector<1x1xf32> to vector<8x1xf32>
    %42 = arith.subf %34, %41 : vector<8x1xf32>
    %43 = math.exp %42 : vector<8x1xf32>
    %c0_22 = arith.constant 0 : index
    %c0_23 = arith.constant 0 : index
    %44 = vector.load %arg18[%c0_22, %c0_23] : memref<1x1xf32, #tpu.memory_space<vmem>>, vector<1x1xf32>
    %45 = arith.mulf %40, %44 : vector<1x1xf32>
    %cst_24 = arith.constant dense<0.000000e+00> : vector<1xf32>
    %46 = vector.multi_reduction <add>, %43, %cst_24 [0] : vector<8x1xf32> to vector<1xf32>
    %47 = vector.shape_cast %46 : vector<1xf32> to vector<1x1xf32>
    %48 = arith.addf %45, %47 : vector<1x1xf32>
    %c0_25 = arith.constant 0 : index
    %c0_26 = arith.constant 0 : index
    %49 = vector.load %arg18[%c0_25, %c0_26] : memref<1x1xf32, #tpu.memory_space<vmem>>, vector<1x1xf32>
    tpu.vector_store %arg18[%c0_25, %c0_26], %48 {strides = array<i32>} : memref<1x1xf32, #tpu.memory_space<vmem>>, vector<1x1xf32>,
    %50 = vector.broadcast %43 : vector<8x1xf32> to vector<8x32xf32>
    %51 = arith.mulf %50, %11 : vector<8x32xf32>
    %52 = vector.shape_cast %51 : vector<8x32xf32> to vector<1x8x32xf32>
    %cst_27 = arith.constant dense<0.000000e+00> : vector<8x32xf32>
    %53 = vector.multi_reduction <add>, %52, %cst_27 [0] : vector<1x8x32xf32> to vector<8x32xf32>
    %c0_28 = arith.constant 0 : index
    %c0_29 = arith.constant 0 : index
    %54 = vector.load %arg19[%c0_28, %c0_29] : memref<8x32xf32, #tpu.memory_space<vmem>>, vector<8x32xf32>
    %55 = vector.broadcast %40 : vector<1x1xf32> to vector<8x32xf32>
    %56 = arith.mulf %55, %54 : vector<8x32xf32>
    %57 = arith.addf %56, %53 : vector<8x32xf32>
    %c0_30 = arith.constant 0 : index
    %c0_31 = arith.constant 0 : index
    %58 = vector.load %arg19[%c0_30, %c0_31] : memref<8x32xf32, #tpu.memory_space<vmem>>, vector<8x32xf32>
    tpu.vector_store %arg19[%c0_30, %c0_31], %57 {strides = array<i32>} : memref<8x32xf32, #tpu.memory_space<vmem>>, vector<8x32xf32>,
    %c0_32 = arith.constant 0 : index
    %c0_33 = arith.constant 0 : index
    %59 = vector.load %arg17[%c0_32, %c0_33] : memref<1x1xf32, #tpu.memory_space<vmem>>, vector<1x1xf32>
    tpu.vector_store %arg17[%c0_32, %c0_33], %38 {strides = array<i32>} : memref<1x1xf32, #tpu.memory_space<vmem>>, vector<1x1xf32>,
    %c0_i32_34 = arith.constant 0 : i32
    %60 = arith.cmpi eq, %arg1, %c0_i32_34 : i32
    %61 = arith.extui %60 : i1 to i32
    %c0_i32_35 = arith.constant 0 : i32
    %62 = arith.cmpi ne, %61, %c0_i32_35 : i32
    scf.if %62 {
      %c0_36 = arith.constant 0 : index
      %c0_37 = arith.constant 0 : index
      %63 = vector.load %arg19[%c0_36, %c0_37] : memref<8x32xf32, #tpu.memory_space<vmem>>, vector<8x32xf32>
      %cst_38 = arith.constant dense<0.000000e+00> : vector<32xf32>
      %64 = vector.multi_reduction <add>, %63, %cst_38 [0] : vector<8x32xf32> to vector<32xf32>
      %65 = vector.shape_cast %64 : vector<32xf32> to vector<1x32xf32>
      %c0_39 = arith.constant 0 : index
      %c0_40 = arith.constant 0 : index
      %66 = vector.load %arg18[%c0_39, %c0_40] : memref<1x1xf32, #tpu.memory_space<vmem>>, vector<1x1xf32>
      %67 = vector.broadcast %66 : vector<1x1xf32> to vector<1x32xf32>
      %68 = arith.divf %65, %67 : vector<1x32xf32>
      %cst_41 = arith.constant dense<0.000000e+00> : vector<1xf32>
      %69 = vector.multi_reduction <add>, %68, %cst_41 [1] : vector<1x32xf32> to vector<1xf32>
      %70 = vector.shape_cast %69 : vector<1xf32> to vector<1x1xf32>
      %cst_42 = arith.constant 3.200000e+01 : f32
      %71 = vector.broadcast %cst_42 : f32 to vector<1x1xf32>
      %72 = arith.divf %70, %71 : vector<1x1xf32>
      %73 = vector.broadcast %72 : vector<1x1xf32> to vector<1x32xf32>
      %74 = arith.subf %68, %73 : vector<1x32xf32>
      %75 = arith.mulf %74, %74 : vector<1x32xf32>
      %cst_43 = arith.constant dense<0.000000e+00> : vector<1xf32>
      %76 = vector.multi_reduction <add>, %75, %cst_43 [1] : vector<1x32xf32> to vector<1xf32>
      %77 = vector.shape_cast %76 : vector<1xf32> to vector<1x1xf32>
      %cst_44 = arith.constant 3.200000e+01 : f32
      %78 = vector.broadcast %cst_44 : f32 to vector<1x1xf32>
      %79 = arith.divf %77, %78 : vector<1x1xf32>
      %80 = vector.broadcast %72 : vector<1x1xf32> to vector<1x32xf32>
      %81 = arith.subf %68, %80 : vector<1x32xf32>
      %cst_45 = arith.constant 9.99999974E-6 : f32
      %82 = vector.broadcast %cst_45 : f32 to vector<1x1xf32>
      %83 = arith.addf %79, %82 : vector<1x1xf32>
      %84 = math.rsqrt %83 : vector<1x1xf32>
      %85 = vector.broadcast %84 : vector<1x1xf32> to vector<1x32xf32>
      %86 = arith.mulf %81, %85 : vector<1x32xf32>
      %c0_46 = arith.constant 0 : index
      %c0_47 = arith.constant 0 : index
      %87 = vector.load %arg9[%c0_46, %c0_47] : memref<1x32xf32, #tpu.memory_space<vmem>>, vector<1x32xf32>
      %88 = arith.mulf %86, %87 : vector<1x32xf32>
      %c0_48 = arith.constant 0 : index
      %c0_49 = arith.constant 0 : index
      %89 = vector.load %arg10[%c0_48, %c0_49] : memref<1x32xf32, #tpu.memory_space<vmem>>, vector<1x32xf32>
      %90 = arith.addf %88, %89 : vector<1x32xf32>
      %c0_50 = arith.constant 0 : index
      %c0_51 = arith.constant 0 : index
      %91 = vector.load %arg11[%c0_50, %c0_51] : memref<32x16xf32, #tpu.memory_space<vmem>>, vector<32x16xf32>
      %cst_52 = arith.constant dense<0.000000e+00> : vector<1x16xf32>
      %92 = tpu.matmul %90, %91, %cst_52 {dimension_numbers = #tpu.dot_dimension_numbers<[1], [0], [0], [1], [0, 0, 1, 1], [], []>} : vector<1x32xf32>, vector<32x16xf32>, vector<1x16xf32> -> vector<1x16xf32>
      %c0_53 = arith.constant 0 : index
      %c0_54 = arith.constant 0 : index
      %93 = vector.load %arg12[%c0_53, %c0_54] : memref<1x16xf32, #tpu.memory_space<vmem>>, vector<1x16xf32>
      %94 = arith.addf %92, %93 : vector<1x16xf32>
      %95 = arith.negf %94 : vector<1x16xf32>
      %96 = math.exp %95 : vector<1x16xf32>
      %cst_55 = arith.constant 1.000000e+00 : f32
      %97 = vector.broadcast %cst_55 : f32 to vector<1x16xf32>
      %98 = arith.addf %97, %96 : vector<1x16xf32>
      %99 = arith.divf %97, %98 : vector<1x16xf32>
      %c0_56 = arith.constant 0 : index
      %c0_57 = arith.constant 0 : index
      %100 = vector.load %arg13[%c0_56, %c0_57] : memref<16x2xf32, #tpu.memory_space<vmem>>, vector<16x2xf32>
      %cst_58 = arith.constant dense<0.000000e+00> : vector<1x2xf32>
      %101 = tpu.matmul %99, %100, %cst_58 {dimension_numbers = #tpu.dot_dimension_numbers<[1], [0], [0], [1], [0, 0, 1, 1], [], []>} : vector<1x16xf32>, vector<16x2xf32>, vector<1x2xf32> -> vector<1x2xf32>
      %c0_59 = arith.constant 0 : index
      %c0_60 = arith.constant 0 : index
      %102 = vector.load %arg14[%c0_59, %c0_60] : memref<1x2xf32, #tpu.memory_space<vmem>>, vector<1x2xf32>
      %103 = arith.addf %101, %102 : vector<1x2xf32>
      %104 = vector.shape_cast %103 : vector<1x2xf32> to vector<1x1x2xf32>
      %c0_61 = arith.constant 0 : index
      %c0_62 = arith.constant 0 : index
      %c0_63 = arith.constant 0 : index
      %105 = vector.load %arg15[%c0_61, %c0_62, %c0_63] : memref<1x1x2xf32, #tpu.memory_space<vmem>>, vector<1x1x2xf32>
      tpu.vector_store %arg15[%c0_61, %c0_62, %c0_63], %104 {strides = array<i32>} : memref<1x1x2xf32, #tpu.memory_space<vmem>>, vector<1x1x2xf32>,
      %106 = vector.shape_cast %68 : vector<1x32xf32> to vector<1x1x32xf32>
      %c0_64 = arith.constant 0 : index
      %c0_65 = arith.constant 0 : index
      %c0_66 = arith.constant 0 : index
      %107 = vector.load %arg16[%c0_64, %c0_65, %c0_66] : memref<1x1x32xf32, #tpu.memory_space<vmem>>, vector<1x1x32xf32>
      tpu.vector_store %arg16[%c0_64, %c0_65, %c0_66], %106 {strides = array<i32>} : memref<1x1x32xf32, #tpu.memory_space<vmem>>, vector<1x1x32xf32>,
    } else {
    }
    return
  }
  func.func @transform_0(%arg0: i32, %arg1: i32) -> (i32, i32, i32) {
    %c0_i32 = arith.constant 0 : i32
    %c0_i32_0 = arith.constant 0 : i32
    return %arg0, %arg1, %c0_i32 : i32, i32, i32
  }
  func.func @transform_1(%arg0: i32, %arg1: i32) -> (i32, i32) {
    %c0_i32 = arith.constant 0 : i32
    %c0_i32_0 = arith.constant 0 : i32
    %c0_i32_1 = arith.constant 0 : i32
    return %c0_i32, %c0_i32_0 : i32, i32
  }
  func.func @transform_2(%arg0: i32, %arg1: i32) -> (i32, i32) {
    %c0_i32 = arith.constant 0 : i32
    %c0_i32_0 = arith.constant 0 : i32
    %c0_i32_1 = arith.constant 0 : i32
    return %c0_i32, %c0_i32_0 : i32, i32
  }
  func.func @transform_3(%arg0: i32, %arg1: i32) -> (i32, i32) {
    %c0_i32 = arith.constant 0 : i32
    %c0_i32_0 = arith.constant 0 : i32
    %c0_i32_1 = arith.constant 0 : i32
    return %c0_i32, %c0_i32_0 : i32, i32
  }
  func.func @transform_4(%arg0: i32, %arg1: i32) -> (i32, i32) {
    %c0_i32 = arith.constant 0 : i32
    %c0_i32_0 = arith.constant 0 : i32
    %c0_i32_1 = arith.constant 0 : i32
    return %c0_i32, %c0_i32_0 : i32, i32
  }
  func.func @transform_5(%arg0: i32, %arg1: i32) -> (i32, i32) {
    %c0_i32 = arith.constant 0 : i32
    %c0_i32_0 = arith.constant 0 : i32
    %c0_i32_1 = arith.constant 0 : i32
    return %c0_i32, %c0_i32_0 : i32, i32
  }
  func.func @transform_6(%arg0: i32, %arg1: i32) -> (i32, i32) {
    %c0_i32 = arith.constant 0 : i32
    %c0_i32_0 = arith.constant 0 : i32
    %c0_i32_1 = arith.constant 0 : i32
    return %c0_i32, %c0_i32_0 : i32, i32
  }
  func.func @transform_7(%arg0: i32, %arg1: i32) -> (i32, i32) {
    %c0_i32 = arith.constant 0 : i32
    %c0_i32_0 = arith.constant 0 : i32
    %c0_i32_1 = arith.constant 0 : i32
    return %c0_i32, %c0_i32_0 : i32, i32
  }
  func.func @transform_8(%arg0: i32, %arg1: i32) -> (i32, i32) {
    %c0_i32 = arith.constant 0 : i32
    %c0_i32_0 = arith.constant 0 : i32
    %c0_i32_1 = arith.constant 0 : i32
    return %c0_i32, %c0_i32_0 : i32, i32
  }
  func.func @transform_9(%arg0: i32, %arg1: i32) -> (i32, i32) {
    %c0_i32 = arith.constant 0 : i32
    %c0_i32_0 = arith.constant 0 : i32
    %c0_i32_1 = arith.constant 0 : i32
    return %c0_i32, %c0_i32_0 : i32, i32
  }
  func.func @transform_10(%arg0: i32, %arg1: i32) -> (i32, i32) {
    %c0_i32 = arith.constant 0 : i32
    %c0_i32_0 = arith.constant 0 : i32
    %c0_i32_1 = arith.constant 0 : i32
    return %c0_i32, %c0_i32_0 : i32, i32
  }
  func.func @transform_11(%arg0: i32, %arg1: i32) -> (i32, i32) {
    %c0_i32 = arith.constant 0 : i32
    %c0_i32_0 = arith.constant 0 : i32
    %c0_i32_1 = arith.constant 0 : i32
    return %c0_i32, %c0_i32_0 : i32, i32
  }
  func.func @transform_12(%arg0: i32, %arg1: i32) -> (i32, i32) {
    %c0_i32 = arith.constant 0 : i32
    %c0_i32_0 = arith.constant 0 : i32
    %c0_i32_1 = arith.constant 0 : i32
    return %c0_i32, %c0_i32_0 : i32, i32
  }
  func.func @transform_13(%arg0: i32, %arg1: i32) -> (i32, i32, i32) {
    %c0_i32 = arith.constant 0 : i32
    %c0_i32_0 = arith.constant 0 : i32
    %c0_i32_1 = arith.constant 0 : i32
    return %arg0, %c0_i32, %c0_i32_0 : i32, i32, i32
  }
  func.func @transform_14(%arg0: i32, %arg1: i32) -> (i32, i32, i32) {
    %c0_i32 = arith.constant 0 : i32
    %c0_i32_0 = arith.constant 0 : i32
    %c0_i32_1 = arith.constant 0 : i32
    return %arg0, %c0_i32, %c0_i32_0 : i32, i32, i32
  }
}

</mosaic_0001>

<llo_original>
// kernel: tpu_custom_call.1
$region0: #{tpu_custom_call.1}
  #allocation0 [shape = 'u32[]', space=smem, size = 0x4, offset = 0x4, fixed_abs, tag = 'smem constant byte address 0x4 - core index']
  #allocation1 [shape = 'u32[144,128]{1,0:T(1,128)}', space=vmem, size = 0x12000, scoped, tag = 'internal scratch']
  #allocation2 [shape = 'f32[1,1]{1,0:T(1,128)}', space=vmem, size = 0x200, scoped, tag = 'scratch operand']
  #allocation3 [shape = 'f32[1,1]{1,0:T(1,128)}', space=vmem, size = 0x200, scoped, tag = 'scratch operand']
  #allocation4 [shape = 'f32[8,32]{1,0:T(8,128)}', space=vmem, size = 0x1000, scoped, tag = 'scratch operand']
  #allocation5 [shape = 'f32[1,1]{1,0:T(1,128)S(1)}', space=vmem, size = 0x200, scoped, tag = 'scoped memory for tpu_custom_call.1']
  %s0 = inlined_call_operand.vmem [shape: bf16[2,8,64], index: 0, kind: input, shape index: {}]
  %s1 = inlined_call_operand.vmem [shape: bf16[64,32], index: 1, kind: input, shape index: {}]
  %s2 = inlined_call_operand.vmem [shape: f32[1,32], index: 2, kind: input, shape index: {}]
  %s3 = inlined_call_operand.vmem [shape: bf16[32,64], index: 3, kind: input, shape index: {}]
  %s4 = inlined_call_operand.vmem [shape: f32[1,64], index: 4, kind: input, shape index: {}]
  %s5 = inlined_call_operand.vmem [shape: f32[1,32], index: 5, kind: input, shape index: {}]
  %s6 = inlined_call_operand.<no memory space> [shape: f32[1,1], index: 6, kind: input, shape index: {}]
  %s7 = inlined_call_operand.vmem [shape: f32[1,32], index: 7, kind: input, shape index: {}]
  %s8 = inlined_call_operand.vmem [shape: f32[1,32], index: 8, kind: input, shape index: {}]
  %s9 = inlined_call_operand.vmem [shape: f32[32,16], index: 9, kind: input, shape index: {}]
  %s10 = inlined_call_operand.vmem [shape: f32[1,16], index: 10, kind: input, shape index: {}]
  %s11 = inlined_call_operand.vmem [shape: f32[16,2], index: 11, kind: input, shape index: {}]
  %s12 = inlined_call_operand.vmem [shape: f32[1,2], index: 12, kind: input, shape index: {}]
  %s13 = inlined_call_operand.hbm [shape: f32[2,1,2], index: 13, kind: output, shape index: {0}]
  %s14 = inlined_call_operand.hbm [shape: f32[2,1,32], index: 14, kind: output, shape index: {1}]
  %15 = xla_tuple %s13, %s14
  %s16 = sld [smem:[#allocation0]]
  $region101: #{tpu_custom_call.1} parent=0
    _
  %s18 = ssub.s32 1, %s16
  %s19 = scalar_select 0, %s18, %s16
  %v20 = vstv %s6
  %21 = vst [vmem:[#allocation5] sm:$0x1] %v20
  $region1: #{tpu_custom_call.1} parent=0
    #allocation6 [shape = 'u8[1024]{0}', space=vmem, size = 0x400, scoped, tag = 'output window, operand 0']
    #allocation7 [shape = 's32[2]{0}', space=sflag, size = 0x8, scoped, tag = 'scoped memory for tpu_custom_call.1']
    #allocation8 [shape = 'u8[1024]{0}', space=vmem, size = 0x400, scoped, tag = 'output window, operand 1']
    #allocation9 [shape = 's32[2]{0}', space=sflag, size = 0x8, scoped, tag = 'scoped memory for tpu_custom_call.1']
    %22 = vsyncpa [#allocation7], 0
    %s23 = scalar_lea.sflag [#allocation7], 1
    %24 = vsyncpa %s23, 0
    %25 = vsyncpa [#allocation9], 0
    %s26 = scalar_lea.sflag [#allocation9], 1
    %27 = vsyncpa %s26, 0
    loop: start=0, step=1, limit=4
    $region2: #{tpu_custom_call.1} parent=1 // loop_pre_header
      _
    $region3: #{tpu_custom_call.1} parent=1 // loop_header
      %s29 = sphi 0, %s33
      %p30 = scmp.ge.s32.totalorder %s29, 4
      %s36 = sphi 0, %s48
      %s37 = sphi 0, %s44
      %s38 = sphi 0, %s36
      %s39 = sphi 0, %s37
      %s40 = sphi 0, %s38
      %s41 = sphi 0, %s39
      %s53 = sphi 0, %s55
      %s56 = sphi 0, %s53
      %s57 = sphi 0, %s56
      %s73 = sphi 0, %s57
      %s77 = sphi 0, %s77
      %s79 = sphi 0, %s77
      %s80 = sphi 0, %s79
      %s94 = sphi 0, %s80
      %s98 = sphi 0, %s98
      %s100 = sphi 0, %s98
      %s101 = sphi 0, %s100
      %s115 = sphi 0, %s101
      %s119 = sphi 0, %s119
      %s121 = sphi 0, %s119
      %s122 = sphi 0, %s121
      %s136 = sphi 0, %s122
      %s140 = sphi 0, %s140
      %s142 = sphi 0, %s140
      %s143 = sphi 0, %s142
      %s157 = sphi 0, %s143
      %s161 = sphi 0, %s161
      %s163 = sphi 0, %s161
      %s164 = sphi 0, %s163
      %s178 = sphi 0, %s164
      %s182 = sphi 0, %s182
      %s184 = sphi 0, %s182
      %s185 = sphi 0, %s184
      %s199 = sphi 0, %s185
      %s203 = sphi 0, %s203
      %s205 = sphi 0, %s203
      %s206 = sphi 0, %s205
      %s220 = sphi 0, %s206
      %s224 = sphi 0, %s224
      %s226 = sphi 0, %s224
      %s227 = sphi 0, %s226
      %s241 = sphi 0, %s227
      %s245 = sphi 0, %s245
      %s247 = sphi 0, %s245
      %s248 = sphi 0, %s247
      %s262 = sphi 0, %s248
      %s266 = sphi 0, %s266
      %s268 = sphi 0, %s266
      %s269 = sphi 0, %s268
      %s283 = sphi 0, %s269
      %s287 = sphi 0, %s287
      %s289 = sphi 0, %s287
      %s290 = sphi 0, %s289
      %s304 = sphi 0, %s290
      %s308 = sphi 0, %s308
      %s310 = sphi 0, %s308
      %s311 = sphi 0, %s310
      %s325 = sphi 0, %s311
      %s331 = sphi 0, %s333
      %s334 = sphi 0, %s331
      %s335 = sphi 0, %s334
      %s351 = sphi 0, %s335
      %s357 = sphi 0, %s359
      %s360 = sphi 0, %s357
      %s361 = sphi 0, %s360
      %s377 = sphi 0, %s361
    $region4: #{tpu_custom_call.1} parent=1 // loop_header_branch
      %32 = sbr.rel (%p30) target = $region8
    $region5: #{tpu_custom_call.1} parent=1 // loop_body
      %s34 = ssub.s32 %s29, 1
      %s35 = ssub.s32 %s29, 2
      %s42 = sadd.s32 1, %s37
      %p43 = scmp.ge.s32.totalorder %s42, 1
      %s44 = scalar_select %p43, 0, %s42
      %s45 = sadd.s32 1, %s36
      %s46 = scalar_select %p43, %s45, %s36
      %p47 = scmp.ge.s32.totalorder %s46, 2
      %s48 = scalar_select %p47, 0, %s46
      %s49 = ssub.s32 %s36, %s48
      %s50 = ssub.s32 %s37, %s44
      %s51 = sor.u32 %s49, %s50
      %p52 = scmp.eq.s32.totalorder %s51, 0
      %s54 = sadd.s32 %s53, 1
      %s55 = scalar_select %p52, %s53, %s54
      %p58 = pneg %p52
      %p59 = scmp.eq.s32.totalorder %s29, 1
      %p60 = por %p58, %p59
      %p61 = scmp.ne.s32.totalorder %s53, %s56
      %p62 = scmp.eq.s32.totalorder %s29, 0
      %p63 = por %p61, %p62
      %p64 = scmp.ne.s32.totalorder %s53, %s56
      %p65 = scmp.eq.s32.totalorder %s34, 1
      %p66 = por %p64, %p65
      %p67 = scmp.ne.s32.totalorder %s56, %s57
      %p68 = scmp.eq.s32.totalorder %s34, 0
      %p69 = por %p67, %p68
      %p70 = scmp.ne.s32.totalorder %s56, %s57
      %p71 = scmp.eq.s32.totalorder %s35, 1
      %p72 = por %p70, %p71
      %p74 = scmp.ne.s32.totalorder %s57, %s73
      %p75 = scmp.eq.s32.totalorder %s35, 0
      %p76 = por %p74, %p75
      %s78 = sadd.s32 %s77, 1
      %p81 = scmp.eq.s32.totalorder %s29, 1
      %p82 = scmp.ne.s32.totalorder %s77, %s79
      %p83 = scmp.eq.s32.totalorder %s29, 0
      %p84 = por %p82, %p83
      %p85 = scmp.ne.s32.totalorder %s77, %s79
      %p86 = scmp.eq.s32.totalorder %s34, 1
      %p87 = por %p85, %p86
      %p88 = scmp.ne.s32.totalorder %s79, %s80
      %p89 = scmp.eq.s32.totalorder %s34, 0
      %p90 = por %p88, %p89
      %p91 = scmp.ne.s32.totalorder %s79, %s80
      %p92 = scmp.eq.s32.totalorder %s35, 1
      %p93 = por %p91, %p92
      %p95 = scmp.ne.s32.totalorder %s80, %s94
      %p96 = scmp.eq.s32.totalorder %s35, 0
      %p97 = por %p95, %p96
      %s99 = sadd.s32 %s98, 1
      %p102 = scmp.eq.s32.totalorder %s29, 1
      %p103 = scmp.ne.s32.totalorder %s98, %s100
      %p104 = scmp.eq.s32.totalorder %s29, 0
      %p105 = por %p103, %p104
      %p106 = scmp.ne.s32.totalorder %s98, %s100
      %p107 = scmp.eq.s32.totalorder %s34, 1
      %p108 = por %p106, %p107
      %p109 = scmp.ne.s32.totalorder %s100, %s101
      %p110 = scmp.eq.s32.totalorder %s34, 0
      %p111 = por %p109, %p110
      %p112 = scmp.ne.s32.totalorder %s100, %s101
      %p113 = scmp.eq.s32.totalorder %s35, 1
      %p114 = por %p112, %p113
      %p116 = scmp.ne.s32.totalorder %s101, %s115
      %p117 = scmp.eq.s32.totalorder %s35, 0
      %p118 = por %p116, %p117
      %s120 = sadd.s32 %s119, 1
      %p123 = scmp.eq.s32.totalorder %s29, 1
      %p124 = scmp.ne.s32.totalorder %s119, %s121
      %p125 = scmp.eq.s32.totalorder %s29, 0
      %p126 = por %p124, %p125
      %p127 = scmp.ne.s32.totalorder %s119, %s121
      %p128 = scmp.eq.s32.totalorder %s34, 1
      %p129 = por %p127, %p128
      %p130 = scmp.ne.s32.totalorder %s121, %s122
      %p131 = scmp.eq.s32.totalorder %s34, 0
      %p132 = por %p130, %p131
      %p133 = scmp.ne.s32.totalorder %s121, %s122
      %p134 = scmp.eq.s32.totalorder %s35, 1
      %p135 = por %p133, %p134
      %p137 = scmp.ne.s32.totalorder %s122, %s136
      %p138 = scmp.eq.s32.totalorder %s35, 0
      %p139 = por %p137, %p138
      %s141 = sadd.s32 %s140, 1
      %p144 = scmp.eq.s32.totalorder %s29, 1
      %p145 = scmp.ne.s32.totalorder %s140, %s142
      %p146 = scmp.eq.s32.totalorder %s29, 0
      %p147 = por %p145, %p146
      %p148 = scmp.ne.s32.totalorder %s140, %s142
      %p149 = scmp.eq.s32.totalorder %s34, 1
      %p150 = por %p148, %p149
      %p151 = scmp.ne.s32.totalorder %s142, %s143
      %p152 = scmp.eq.s32.totalorder %s34, 0
      %p153 = por %p151, %p152
      %p154 = scmp.ne.s32.totalorder %s142, %s143
      %p155 = scmp.eq.s32.totalorder %s35, 1
      %p156 = por %p154, %p155
      %p158 = scmp.ne.s32.totalorder %s143, %s157
      %p159 = scmp.eq.s32.totalorder %s35, 0
      %p160 = por %p158, %p159
      %s162 = sadd.s32 %s161, 1
      %p165 = scmp.eq.s32.totalorder %s29, 1
      %p166 = scmp.ne.s32.totalorder %s161, %s163
      %p167 = scmp.eq.s32.totalorder %s29, 0
      %p168 = por %p166, %p167
      %p169 = scmp.ne.s32.totalorder %s161, %s163
      %p170 = scmp.eq.s32.totalorder %s34, 1
      %p171 = por %p169, %p170
      %p172 = scmp.ne.s32.totalorder %s163, %s164
      %p173 = scmp.eq.s32.totalorder %s34, 0
      %p174 = por %p172, %p173
      %p175 = scmp.ne.s32.totalorder %s163, %s164
      %p176 = scmp.eq.s32.totalorder %s35, 1
      %p177 = por %p175, %p176
      %p179 = scmp.ne.s32.totalorder %s164, %s178
      %p180 = scmp.eq.s32.totalorder %s35, 0
      %p181 = por %p179, %p180
      %s183 = sadd.s32 %s182, 1
      %p186 = scmp.eq.s32.totalorder %s29, 1
      %p187 = scmp.ne.s32.totalorder %s182, %s184
      %p188 = scmp.eq.s32.totalorder %s29, 0
      %p189 = por %p187, %p188
      %p190 = scmp.ne.s32.totalorder %s182, %s184
      %p191 = scmp.eq.s32.totalorder %s34, 1
      %p192 = por %p190, %p191
      %p193 = scmp.ne.s32.totalorder %s184, %s185
      %p194 = scmp.eq.s32.totalorder %s34, 0
      %p195 = por %p193, %p194
      %p196 = scmp.ne.s32.totalorder %s184, %s185
      %p197 = scmp.eq.s32.totalorder %s35, 1
      %p198 = por %p196, %p197
      %p200 = scmp.ne.s32.totalorder %s185, %s199
      %p201 = scmp.eq.s32.totalorder %s35, 0
      %p202 = por %p200, %p201
      %s204 = sadd.s32 %s203, 1
      %p207 = scmp.eq.s32.totalorder %s29, 1
      %p208 = scmp.ne.s32.totalorder %s203, %s205
      %p209 = scmp.eq.s32.totalorder %s29, 0
      %p210 = por %p208, %p209
      %p211 = scmp.ne.s32.totalorder %s203, %s205
      %p212 = scmp.eq.s32.totalorder %s34, 1
      %p213 = por %p211, %p212
      %p214 = scmp.ne.s32.totalorder %s205, %s206
      %p215 = scmp.eq.s32.totalorder %s34, 0
      %p216 = por %p214, %p215
      %p217 = scmp.ne.s32.totalorder %s205, %s206
      %p218 = scmp.eq.s32.totalorder %s35, 1
      %p219 = por %p217, %p218
      %p221 = scmp.ne.s32.totalorder %s206, %s220
      %p222 = scmp.eq.s32.totalorder %s35, 0
      %p223 = por %p221, %p222
      %s225 = sadd.s32 %s224, 1
      %p228 = scmp.eq.s32.totalorder %s29, 1
      %p229 = scmp.ne.s32.totalorder %s224, %s226
      %p230 = scmp.eq.s32.totalorder %s29, 0
      %p231 = por %p229, %p230
      %p232 = scmp.ne.s32.totalorder %s224, %s226
      %p233 = scmp.eq.s32.totalorder %s34, 1
      %p234 = por %p232, %p233
      %p235 = scmp.ne.s32.totalorder %s226, %s227
      %p236 = scmp.eq.s32.totalorder %s34, 0
      %p237 = por %p235, %p236
      %p238 = scmp.ne.s32.totalorder %s226, %s227
      %p239 = scmp.eq.s32.totalorder %s35, 1
      %p240 = por %p238, %p239
      %p242 = scmp.ne.s32.totalorder %s227, %s241
      %p243 = scmp.eq.s32.totalorder %s35, 0
      %p244 = por %p242, %p243
      %s246 = sadd.s32 %s245, 1
      %p249 = scmp.eq.s32.totalorder %s29, 1
      %p250 = scmp.ne.s32.totalorder %s245, %s247
      %p251 = scmp.eq.s32.totalorder %s29, 0
      %p252 = por %p250, %p251
      %p253 = scmp.ne.s32.totalorder %s245, %s247
      %p254 = scmp.eq.s32.totalorder %s34, 1
      %p255 = por %p253, %p254
      %p256 = scmp.ne.s32.totalorder %s247, %s248
      %p257 = scmp.eq.s32.totalorder %s34, 0
      %p258 = por %p256, %p257
      %p259 = scmp.ne.s32.totalorder %s247, %s248
      %p260 = scmp.eq.s32.totalorder %s35, 1
      %p261 = por %p259, %p260
      %p263 = scmp.ne.s32.totalorder %s248, %s262
      %p264 = scmp.eq.s32.totalorder %s35, 0
      %p265 = por %p263, %p264
      %s267 = sadd.s32 %s266, 1
      %p270 = scmp.eq.s32.totalorder %s29, 1
      %p271 = scmp.ne.s32.totalorder %s266, %s268
      %p272 = scmp.eq.s32.totalorder %s29, 0
      %p273 = por %p271, %p272
      %p274 = scmp.ne.s32.totalorder %s266, %s268
      %p275 = scmp.eq.s32.totalorder %s34, 1
      %p276 = por %p274, %p275
      %p277 = scmp.ne.s32.totalorder %s268, %s269
      %p278 = scmp.eq.s32.totalorder %s34, 0
      %p279 = por %p277, %p278
      %p280 = scmp.ne.s32.totalorder %s268, %s269
      %p281 = scmp.eq.s32.totalorder %s35, 1
      %p282 = por %p280, %p281
      %p284 = scmp.ne.s32.totalorder %s269, %s283
      %p285 = scmp.eq.s32.totalorder %s35, 0
      %p286 = por %p284, %p285
      %s288 = sadd.s32 %s287, 1
      %p291 = scmp.eq.s32.totalorder %s29, 1
      %p292 = scmp.ne.s32.totalorder %s287, %s289
      %p293 = scmp.eq.s32.totalorder %s29, 0
      %p294 = por %p292, %p293
      %p295 = scmp.ne.s32.totalorder %s287, %s289
      %p296 = scmp.eq.s32.totalorder %s34, 1
      %p297 = por %p295, %p296
      %p298 = scmp.ne.s32.totalorder %s289, %s290
      %p299 = scmp.eq.s32.totalorder %s34, 0
      %p300 = por %p298, %p299
      %p301 = scmp.ne.s32.totalorder %s289, %s290
      %p302 = scmp.eq.s32.totalorder %s35, 1
      %p303 = por %p301, %p302
      %p305 = scmp.ne.s32.totalorder %s290, %s304
      %p306 = scmp.eq.s32.totalorder %s35, 0
      %p307 = por %p305, %p306
      %s309 = sadd.s32 %s308, 1
      %p312 = scmp.eq.s32.totalorder %s29, 1
      %p313 = scmp.ne.s32.totalorder %s308, %s310
      %p314 = scmp.eq.s32.totalorder %s29, 0
      %p315 = por %p313, %p314
      %p316 = scmp.ne.s32.totalorder %s308, %s310
      %p317 = scmp.eq.s32.totalorder %s34, 1
      %p318 = por %p316, %p317
      %p319 = scmp.ne.s32.totalorder %s310, %s311
      %p320 = scmp.eq.s32.totalorder %s34, 0
      %p321 = por %p319, %p320
      %p322 = scmp.ne.s32.totalorder %s310, %s311
      %p323 = scmp.eq.s32.totalorder %s35, 1
      %p324 = por %p322, %p323
      %p326 = scmp.ne.s32.totalorder %s311, %s325
      %p327 = scmp.eq.s32.totalorder %s35, 0
      %p328 = por %p326, %p327
      %s329 = ssub.s32 %s36, %s48
      %p330 = scmp.eq.s32.totalorder %s329, 0
      %s332 = sadd.s32 %s331, 1
      %s333 = scalar_select %p330, %s331, %s332
      %p336 = pneg %p330
      %p337 = scmp.eq.s32.totalorder %s29, 1
      %p338 = por %p336, %p337
      %p339 = scmp.ne.s32.totalorder %s331, %s334
      %p340 = scmp.eq.s32.totalorder %s29, 0
      %p341 = por %p339, %p340
      %p342 = scmp.ne.s32.totalorder %s331, %s334
      %p343 = scmp.eq.s32.totalorder %s34, 1
      %p344 = por %p342, %p343
      %p345 = scmp.ne.s32.totalorder %s334, %s335
      %p346 = scmp.eq.s32.totalorder %s34, 0
      %p347 = por %p345, %p346
      %p348 = scmp.ne.s32.totalorder %s334, %s335
      %p349 = scmp.eq.s32.totalorder %s35, 1
      %p350 = por %p348, %p349
      %p352 = scmp.ne.s32.totalorder %s335, %s351
      %p353 = scmp.eq.s32.totalorder %s35, 0
      %p354 = por %p352, %p353
      %s355 = ssub.s32 %s36, %s48
      %p356 = scmp.eq.s32.totalorder %s355, 0
      %s358 = sadd.s32 %s357, 1
      %s359 = scalar_select %p356, %s357, %s358
      %p362 = pneg %p356
      %p363 = scmp.eq.s32.totalorder %s29, 1
      %p364 = por %p362, %p363
      %p365 = scmp.ne.s32.totalorder %s357, %s360
      %p366 = scmp.eq.s32.totalorder %s29, 0
      %p367 = por %p365, %p366
      %p368 = scmp.ne.s32.totalorder %s357, %s360
      %p369 = scmp.eq.s32.totalorder %s34, 1
      %p370 = por %p368, %p369
      %p371 = scmp.ne.s32.totalorder %s360, %s361
      %p372 = scmp.eq.s32.totalorder %s34, 0
      %p373 = por %p371, %p372
      %p374 = scmp.ne.s32.totalorder %s360, %s361
      %p375 = scmp.eq.s32.totalorder %s35, 1
      %p376 = por %p374, %p375
      %p378 = scmp.ne.s32.totalorder %s361, %s377
      %p379 = scmp.eq.s32.totalorder %s35, 0
      %p380 = por %p378, %p379
      %p381 = scmp.le.s32.totalorder 1, %s29
      %p382 = scmp.lt.s32.totalorder %s29, 3
      %p383 = pnand %p381, %p382
      %p384 = pneg %p383
      // Predicated region
      $region9: #{tpu_custom_call.1} parent=5 // pred_check
        _
      $region10: #{tpu_custom_call.1} parent=5 // pred_check_branch
        %386 = sbr.rel (%p383) target = $region12
      $region11: #{tpu_custom_call.1} parent=5 // pred_region
        %s387 = ssub.s32 %s29, 1
        // Predicated region
        $region13: #{tpu_custom_call.1} parent=11 // pred_check
          %p388 = pneg %p90
        $region14: #{tpu_custom_call.1} parent=11 // pred_check_branch
          %390 = sbr.rel (%p388) target = $region16
        $region15: #{tpu_custom_call.1} parent=11 // pred_region
          _
        $region16: #{tpu_custom_call.1} parent=11 // pred_fallthru
          _
        // Predicated region
        $region17: #{tpu_custom_call.1} parent=11 // pred_check
          %p391 = pneg %p111
        $region18: #{tpu_custom_call.1} parent=11 // pred_check_branch
          %393 = sbr.rel (%p391) target = $region20
        $region19: #{tpu_custom_call.1} parent=11 // pred_region
          _
        $region20: #{tpu_custom_call.1} parent=11 // pred_fallthru
          _
        // Predicated region
        $region21: #{tpu_custom_call.1} parent=11 // pred_check
          %p394 = pneg %p132
        $region22: #{tpu_custom_call.1} parent=11 // pred_check_branch
          %396 = sbr.rel (%p394) target = $region24
        $region23: #{tpu_custom_call.1} parent=11 // pred_region
          _
        $region24: #{tpu_custom_call.1} parent=11 // pred_fallthru
          _
        // Predicated region
        $region25: #{tpu_custom_call.1} parent=11 // pred_check
          %p397 = pneg %p153
        $region26: #{tpu_custom_call.1} parent=11 // pred_check_branch
          %399 = sbr.rel (%p397) target = $region28
        $region27: #{tpu_custom_call.1} parent=11 // pred_region
          _
        $region28: #{tpu_custom_call.1} parent=11 // pred_fallthru
          _
        // Predicated region
        $region29: #{tpu_custom_call.1} parent=11 // pred_check
          %p400 = pneg %p174
        $region30: #{tpu_custom_call.1} parent=11 // pred_check_branch
          %402 = sbr.rel (%p400) target = $region32
        $region31: #{tpu_custom_call.1} parent=11 // pred_region
          _
        $region32: #{tpu_custom_call.1} parent=11 // pred_fallthru
          _
        // Predicated region
        $region33: #{tpu_custom_call.1} parent=11 // pred_check
          %p403 = pneg %p195
        $region34: #{tpu_custom_call.1} parent=11 // pred_check_branch
          %405 = sbr.rel (%p403) target = $region36
        $region35: #{tpu_custom_call.1} parent=11 // pred_region
          _
        $region36: #{tpu_custom_call.1} parent=11 // pred_fallthru
          _
        // Predicated region
        $region37: #{tpu_custom_call.1} parent=11 // pred_check
          %p406 = pneg %p216
        $region38: #{tpu_custom_call.1} parent=11 // pred_check_branch
          %408 = sbr.rel (%p406) target = $region40
        $region39: #{tpu_custom_call.1} parent=11 // pred_region
          _
        $region40: #{tpu_custom_call.1} parent=11 // pred_fallthru
          _
        // Predicated region
        $region41: #{tpu_custom_call.1} parent=11 // pred_check
          %p409 = pneg %p237
        $region42: #{tpu_custom_call.1} parent=11 // pred_check_branch
          %411 = sbr.rel (%p409) target = $region44
        $region43: #{tpu_custom_call.1} parent=11 // pred_region
          _
        $region44: #{tpu_custom_call.1} parent=11 // pred_fallthru
          _
        // Predicated region
        $region45: #{tpu_custom_call.1} parent=11 // pred_check
          %p412 = pneg %p258
        $region46: #{tpu_custom_call.1} parent=11 // pred_check_branch
          %414 = sbr.rel (%p412) target = $region48
        $region47: #{tpu_custom_call.1} parent=11 // pred_region
          _
        $region48: #{tpu_custom_call.1} parent=11 // pred_fallthru
          _
        // Predicated region
        $region49: #{tpu_custom_call.1} parent=11 // pred_check
          %p415 = pneg %p279
        $region50: #{tpu_custom_call.1} parent=11 // pred_check_branch
          %417 = sbr.rel (%p415) target = $region52
        $region51: #{tpu_custom_call.1} parent=11 // pred_region
          _
        $region52: #{tpu_custom_call.1} parent=11 // pred_fallthru
          _
        // Predicated region
        $region53: #{tpu_custom_call.1} parent=11 // pred_check
          %p418 = pneg %p300
        $region54: #{tpu_custom_call.1} parent=11 // pred_check_branch
          %420 = sbr.rel (%p418) target = $region56
        $region55: #{tpu_custom_call.1} parent=11 // pred_region
          _
        $region56: #{tpu_custom_call.1} parent=11 // pred_fallthru
          _
        // Predicated region
        $region57: #{tpu_custom_call.1} parent=11 // pred_check
          %p421 = pneg %p321
        $region58: #{tpu_custom_call.1} parent=11 // pred_check_branch
          %423 = sbr.rel (%p421) target = $region60
        $region59: #{tpu_custom_call.1} parent=11 // pred_region
          _
        $region60: #{tpu_custom_call.1} parent=11 // pred_fallthru
          _
      $region12: #{tpu_custom_call.1} parent=5 // pred_fallthru
        _
      %p424 = scmp.lt.s32.totalorder %s29, 2
      // Predicated region
      $region61: #{tpu_custom_call.1} parent=5 // pred_check
        %p425 = pneg %p424
      $region62: #{tpu_custom_call.1} parent=5 // pred_check_branch
        %427 = sbr.rel (%p425) target = $region64
      $region63: #{tpu_custom_call.1} parent=5 // pred_region
        // Predicated region
        $region65: #{tpu_custom_call.1} parent=63 // pred_check
          %p428 = pneg %p63
        $region66: #{tpu_custom_call.1} parent=63 // pred_check_branch
          %430 = sbr.rel (%p428) target = $region68
        $region67: #{tpu_custom_call.1} parent=63 // pred_region
          %p431 = scmp.lt.s32.totalorder %s36, 1
          %s432 = scalar_select %p431, %s36, 1
          %p433 = scmp.lt.s32.totalorder %s37, 0
          %s434 = scalar_select %p433, %s37, 0
          %s435 = sadd.s32 %s434, %s432
          %s436 = smul.addr %s435, 4
          %s437 = scalar_lea.vmem %s0, %s436
        $region68: #{tpu_custom_call.1} parent=63 // pred_fallthru
          _
      $region64: #{tpu_custom_call.1} parent=5 // pred_fallthru
        _
      %p438 = scmp.le.s32.totalorder 1, %s29
      %p439 = scmp.lt.s32.totalorder %s29, 3
      %p440 = pnand %p438, %p439
      %p441 = pneg %p440
      // Predicated region
      $region69: #{tpu_custom_call.1} parent=5 // pred_check
        _
      $region70: #{tpu_custom_call.1} parent=5 // pred_check_branch
        %443 = sbr.rel (%p440) target = $region72
      $region71: #{tpu_custom_call.1} parent=5 // pred_region
        %s444 = ssub.s32 %s29, 1
        %p445 = scmp.lt.s32.totalorder %s38, 1
        %s446 = scalar_select %p445, %s38, 1
        %p447 = scmp.lt.s32.totalorder %s39, 0
        %s448 = scalar_select %p447, %s39, 0
        %s449 = sadd.s32 %s448, %s446
        %s450 = smul.addr %s449, 4
        %s451 = scalar_lea.vmem %s0, %s450
        %p452 = pneg %p69
        %p453 = pneg %p66
        %p454 = pneg %p90
        %p455 = pneg %p87
        %p456 = pneg %p111
        %p457 = pneg %p108
        %p458 = pneg %p132
        %p459 = pneg %p129
        %p460 = pneg %p153
        %p461 = pneg %p150
        %p462 = pneg %p174
        %p463 = pneg %p171
        %p464 = pneg %p195
        %p465 = pneg %p192
        %p466 = pneg %p216
        %p467 = pneg %p213
        %p468 = pneg %p237
        %p469 = pneg %p234
        %p470 = pneg %p258
        %p471 = pneg %p255
        %p472 = pneg %p279
        %p473 = pneg %p276
        %p474 = pneg %p300
        %p475 = pneg %p297
        %p476 = pneg %p321
        %p477 = pneg %p318
        %p478 = pneg %p347
        %p479 = pneg %p344
        %s480 = sand.u32 %s334, 1
        %s481 = scalar_lea.sflag [#allocation7], %s480
        %s482 = sand.u32 %s334, 1
        %s483 = scalar_lea.vmem [#allocation6], %s482
        %p484 = pneg %p373
        %p485 = pneg %p370
        %s486 = sand.u32 %s360, 1
        %s487 = scalar_lea.sflag [#allocation9], %s486
        %s488 = sand.u32 %s360, 1
        %s489 = scalar_lea.vmem [#allocation8], %s488
        %p490 = scmp.lt.s32.totalorder %s38, 1
        %s491 = scalar_select %p490, %s38, 1
        %p492 = scmp.lt.s32.totalorder %s39, 0
        %s493 = scalar_select %p492, %s39, 0
        %s494 = sadd.s32 %s493, %s491
        %s495 = smul.addr %s494, 4
        %s496 = scalar_lea.vmem %s0, %s495
        %p498 = scmp.eq.s32.totalorder %s39, 0
        // Predicated region
        $region73: #{tpu_custom_call.1} parent=71 // pred_check
          %p499 = pneg %p498
        $region74: #{tpu_custom_call.1} parent=71 // pred_check_branch
          %501 = sbr.rel (%p499) target = $region76
        $region75: #{tpu_custom_call.1} parent=71 // pred_region
          %vm502 = vcmask 0
          %503 = vst.msk [vmem:[#allocation2] sm:$0x1] %vm502, -inf
          %504 = vst.msk [vmem:[#allocation3] sm:$0x1] %vm502, 0.0
          %vm505 = vcmask 261120
          %506 = vst.msk [vmem:[#allocation4] sm:$0xff] %vm505, 0.0
        $region76: #{tpu_custom_call.1} parent=71 // pred_fallthru
          _
        %v507 = vld [vmem:[%s496] sm:$0xf]
        %v508 = vld [vmem:[%s1] sm:$0xf]
        %v509 = vld [vmem:[%s1 + $0x4] sm:$0xf]
        %v510 = vld [vmem:[%s1 + $0x8] sm:$0xf]
        %v511 = vld [vmem:[%s1 + $0xc] sm:$0xf]
        %v512 = vld [vmem:[%s1 + $0x10] sm:$0xf]
        %v513 = vld [vmem:[%s1 + $0x14] sm:$0xf]
        %v514 = vld [vmem:[%s1 + $0x18] sm:$0xf]
        %v515 = vld [vmem:[%s1 + $0x1c] sm:$0xf]
        %v516 = vld [vmem:[%s2] sm:$0x1]
        %v518 = vlaneseq
        %v519 = vshrl.u32 %v518, 7
        %v520 = vsub.s32 0, %v519
        %v521 = vrot.slane %v516, %v520
        %v531 = vunpack.c.l.b16 %v508
        %v532 = vunpack.c.l.b16 %v509
        %v533 = vunpack.c.l.b16 %v510
        %v534 = vunpack.c.l.b16 %v511
        %v535 = vunpack.c.l.b16 %v512
        %v536 = vunpack.c.l.b16 %v513
        %v537 = vunpack.c.l.b16 %v514
        %v538 = vunpack.c.l.b16 %v515
        %v539 = vpack.c.b16 %v532, %v531
        %v540 = vpack.c.b16 %v534, %v533
        %v541 = vpack.c.b16 %v536, %v535
        %v542 = vpack.c.b16 %v538, %v537
        %vm547 = vcmask 523264
        %v549 = vsel %vm547, %v507, 0
        %551 = vmatprep.subr.bf16.mxu0 0
        %552 = vmatpush1.bf16.msra.mxu0 %v539
        %553 = vmatprep.subr.bf16.mxu0 0
        %554 = vmatpush1.bf16.msra.mxu0 %v540
        %555 = vmatprep.subr.bf16.mxu0 0
        %556 = vmatpush1.bf16.msra.mxu0 %v541
        %557 = vmatprep.subr.bf16.mxu0 0
        %558 = vmatpush1.bf16.msra.mxu0 %v542
        %559 = vmatprep.subr.bf16.mxu0 0
        %560 = vmatpush1.bf16.msra.mxu0 0
        %561 = vmatprep.subr.bf16.mxu0 0
        %562 = vmatpush1.bf16.msra.mxu0 0
        %563 = vmatprep.subr.bf16.mxu0 0
        %564 = vmatpush1.bf16.msra.mxu0 0
        %565 = vmatprep.subr.bf16.mxu0 0
        %566 = vmatpush1.bf16.msra.mxu0 0
        %567 = vmatprep.subr.bf16.mxu0 0
        %568 = vmatpush1.bf16.msra.mxu0 0
        %569 = vmatprep.subr.bf16.mxu0 0
        %570 = vmatpush1.bf16.msra.mxu0 0
        %571 = vmatprep.subr.bf16.mxu0 0
        %572 = vmatpush1.bf16.msra.mxu0 0
        %573 = vmatprep.subr.bf16.mxu0 0
        %574 = vmatpush1.bf16.msra.mxu0 0
        %575 = vmatprep.subr.bf16.mxu0 0
        %576 = vmatpush1.bf16.msra.mxu0 0
        %577 = vmatprep.subr.bf16.mxu0 0
        %578 = vmatpush1.bf16.msra.mxu0 0
        %579 = vmatprep.subr.bf16.mxu0 0
        %580 = vmatpush1.bf16.msra.mxu0 0
        %581 = vmatprep.subr.bf16.mxu0 0
        %582 = vmatpush1.bf16.msra.mxu0 0
        %583 = vmatprep.mubr.bf16.mxu0 0
        %584 = vmatmul.mubr.bf16.gmra.mrb[0].mxu0 %v549
        %v585 = vpop.f32.mrb[0].mxu0
        %v586 = vadd.f32 %v521, %v585
        %v587 = vpop.f32.mrb[0].mxu0
        %v588 = vpop.f32.mrb[0].mxu0
        %v589 = vpop.f32.mrb[0].mxu0
        %590 = vdwg.mxu0
        %v591 = vmax.f32 %v586, 0.0
        %v592 = vpack.c.bf16 %v591, %v591
        %v593 = vld [vmem:[%s3] sm:$0xf]
        %v594 = vld [vmem:[%s3 + $0x4] sm:$0xf]
        %v595 = vld [vmem:[%s3 + $0x8] sm:$0xf]
        %v596 = vld [vmem:[%s3 + $0xc] sm:$0xf]
        %v597 = vld [vmem:[%s4] sm:$0x1]
        %v599 = vlaneseq
        %v600 = vshrl.u32 %v599, 7
        %v601 = vsub.s32 0, %v600
        %v602 = vrot.slane %v597, %v601
        %v608 = vunpack.c.l.b16 %v593
        %v609 = vunpack.c.l.b16 %v594
        %v610 = vunpack.c.l.b16 %v595
        %v611 = vunpack.c.l.b16 %v596
        %v612 = vpack.c.b16 %v609, %v608
        %v613 = vpack.c.b16 %v611, %v610
        %vm616 = vcmask 261120
        %v618 = vsel %vm616, %v592, 0
        %620 = vmatprep.subr.bf16.mxu0 0
        %621 = vmatpush1.bf16.msra.mxu0 %v612
        %622 = vmatprep.subr.bf16.mxu0 0
        %623 = vmatpush1.bf16.msra.mxu0 %v613
        %624 = vmatprep.subr.bf16.mxu0 0
        %625 = vmatpush1.bf16.msra.mxu0 0
        %626 = vmatprep.subr.bf16.mxu0 0
        %627 = vmatpush1.bf16.msra.mxu0 0
        %628 = vmatprep.subr.bf16.mxu0 0
        %629 = vmatpush1.bf16.msra.mxu0 0
        %630 = vmatprep.subr.bf16.mxu0 0
        %631 = vmatpush1.bf16.msra.mxu0 0
        %632 = vmatprep.subr.bf16.mxu0 0
        %633 = vmatpush1.bf16.msra.mxu0 0
        %634 = vmatprep.subr.bf16.mxu0 0
        %635 = vmatpush1.bf16.msra.mxu0 0
        %636 = vmatprep.subr.bf16.mxu0 0
        %637 = vmatpush1.bf16.msra.mxu0 0
        %638 = vmatprep.subr.bf16.mxu0 0
        %639 = vmatpush1.bf16.msra.mxu0 0
        %640 = vmatprep.subr.bf16.mxu0 0
        %641 = vmatpush1.bf16.msra.mxu0 0
        %642 = vmatprep.subr.bf16.mxu0 0
        %643 = vmatpush1.bf16.msra.mxu0 0
        %644 = vmatprep.subr.bf16.mxu0 0
        %645 = vmatpush1.bf16.msra.mxu0 0
        %646 = vmatprep.subr.bf16.mxu0 0
        %647 = vmatpush1.bf16.msra.mxu0 0
        %648 = vmatprep.subr.bf16.mxu0 0
        %649 = vmatpush1.bf16.msra.mxu0 0
        %650 = vmatprep.subr.bf16.mxu0 0
        %651 = vmatpush1.bf16.msra.mxu0 0
        %652 = vmatprep.mubr.bf16.mxu0 0
        %653 = vmatmul.mubr.bf16.gmra.mrb[0].mxu0 %v618
        %v654 = vpop.f32.mrb[0].mxu0
        %v655 = vadd.f32 %v602, %v654
        %v656 = vpop.f32.mrb[0].mxu0
        %v657 = vpop.f32.mrb[0].mxu0
        %v658 = vpop.f32.mrb[0].mxu0
        %659 = vdwg.mxu0
        %v660 = vtanh.pop %v655
        %v661 = vxor.u32 %v655, 2147483648
        %v662 = vmul.f32 %v661, 1.442695
        %v663 = vpow.pop %v662
        %v664 = vadd.f32 %v663, 1.0
        %v665 = vrcp.pop %v664
        %v666 = vmul.f32 1.0, %v665
        %668 = vrot.lane.b32.xlu0 %v666, 96
        %v669 = vpop.permute.xlu0 %668
        %v671 = vmul.f32 %v660, %v669
        %v672 = vld [vmem:[%s5] sm:$0x1]
        %v674 = vlaneseq
        %v675 = vshrl.u32 %v674, 7
        %v676 = vsub.s32 0, %v675
        %v677 = vrot.slane %v672, %v676
        %v679 = vmul.f32 %v671, %v677
        %v680 = vsel %vm616, %v679, 0.0
        %681 = vadd.xlane.f32.xlu0 %v680
        %v682 = vpop.xlane.xlu0 %681
        %v683 = vld [vmem:[#allocation5] sm:$0x1]
        %v685 = vlaneseq
        %v686 = vshrl.u32 %v685, 7
        %v687 = vsub.s32 0, %v686
        %v688 = vrot.slane %v683, %v687
        %v690 = vadd.f32 %v682, %v688
        %v691 = vld [vmem:[#allocation2] sm:$0x1]
        %vm692 = vcmask 7168
        %v693 = vsel %vm692, %v690, -inf
        %v694 = vrot.slane %v693, 4
        %v695 = vmax.f32 %v693, %v694
        %v696 = vrot.slane %v695, 2
        %v697 = vmax.f32 %v695, %v696
        %v698 = vrot.slane %v697, 1
        %v699 = vmax.f32 %v697, %v698
        %v700 = vmax.f32 %v691, %v699
        %v701 = vsub.f32 %v691, %v700
        %v702 = vmul.f32 %v701, 1.442695
        %v703 = vpow.pop %v702
        %v705 = vlaneseq
        %v706 = vshrl.u32 %v705, 7
        %v707 = vsub.s32 0, %v706
        %v708 = vrot.slane %v700, %v707
        %v710 = vsub.f32 %v690, %v708
        %v711 = vmul.f32 %v710, 1.442695
        %v712 = vpow.pop %v711
        %v713 = vld [vmem:[#allocation3] sm:$0x1]
        %v714 = vmul.f32 %v703, %v713
        %v715 = vsel %vm692, %v712, 0.0
        %v716 = vrot.slane %v715, 4
        %v717 = vadd.f32 %v715, %v716
        %v718 = vrot.slane %v717, 2
        %v719 = vadd.f32 %v717, %v718
        %v720 = vrot.slane %v719, 1
        %v721 = vadd.f32 %v719, %v720
        %v722 = vadd.f32 %v714, %v721
        %vm723 = vcmask 0
        %724 = vst.msk [vmem:[#allocation3] sm:$0x1] %vm723, %v722
        %726 = vset.pattern.permute.xlu0 0
        %727 = vperm.xlu0 %726, %v712
        %v728 = vpop.permute.xlu0 %727
        %v730 = vmul.f32 %v728, %v591
        %v731 = vadd.f32 %v730, 0.0
        %v732 = vld [vmem:[#allocation4] sm:$0xff]
        %v734 = vlaneseq
        %v735 = vshrl.u32 %v734, 7
        %v736 = vsub.s32 0, %v735
        %v737 = vrot.slane %v703, %v736
        %738 = vset.pattern.permute.xlu0 0
        %739 = vperm.xlu0 %738, %v737
        %v740 = vpop.permute.xlu0 %739
        %v742 = vmul.f32 %v740, %v732
        %v743 = vadd.f32 %v742, %v731
        %744 = vst.msk [vmem:[#allocation4] sm:$0xff] %vm616, %v743
        %745 = vst.msk [vmem:[#allocation2] sm:$0x1] %vm723, %v700
        // Predicated region
        $region77: #{tpu_custom_call.1} parent=71 // pred_check
          %p746 = pneg %p498
        $region78: #{tpu_custom_call.1} parent=71 // pred_check_branch
          %748 = sbr.rel (%p746) target = $region80
        $region79: #{tpu_custom_call.1} parent=71 // pred_region
          %v749 = vld [vmem:[#allocation4] sm:$0xff]
          %v750 = vsel %vm616, %v749, 0.0
          %v751 = vrot.slane %v750, 4
          %v752 = vadd.f32 %v750, %v751
          %v753 = vrot.slane %v752, 2
          %v754 = vadd.f32 %v752, %v753
          %v755 = vrot.slane %v754, 1
          %v756 = vadd.f32 %v754, %v755
          %v757 = vld [vmem:[#allocation3] sm:$0x1]
          %759 = vset.pattern.permute.xlu0 0
          %760 = vperm.xlu0 %759, %v757
          %v761 = vpop.permute.xlu0 %760
          %v763 = vlaneseq
          %v764 = vshrl.u32 %v763, 7
          %v765 = vsub.s32 0, %v764
          %v766 = vrot.slane %v761, %v765
          %v767 = vrcp.pop %v766
          %v768 = vmul.f32 %v756, %v767
          %v769 = vsel %vm616, %v768, 0.0
          %770 = vadd.xlane.f32.xlu0 %v769
          %v771 = vpop.xlane.xlu0 %770
          %v772 = vrcp.pop 32.0
          %v773 = vmul.f32 %v771, %v772
          %v774 = vsub.f32 %v768, %v773
          %v775 = vmul.f32 %v774, %v774
          %v776 = vsel %vm616, %v775, 0.0
          %777 = vadd.xlane.f32.xlu0 %v776
          %v778 = vpop.xlane.xlu0 %777
          %v779 = vmul.f32 %v778, %v772
          %v780 = vadd.f32 %v779, 1e-05
          %v781 = vrsqrt.pop %v780
          %v782 = vmul.f32 %v774, %v781
          %v783 = vld [vmem:[%s7] sm:$0x1]
          %v784 = vmul.f32 %v782, %v783
          %v785 = vld [vmem:[%s8] sm:$0x1]
          %v786 = vadd.f32 %v784, %v785
          %v787 = vld [vmem:[%s9] sm:$0xff]
          %v788 = vld [vmem:[%s9 + $0x8] sm:$0xff]
          %v789 = vld [vmem:[%s9 + $0x10] sm:$0xff]
          %v790 = vld [vmem:[%s9 + $0x18] sm:$0xff]
          %v791 = vld [vmem:[%s10] sm:$0x1]
          %v793 = vsel %vm616, %v786, 0
          %795 = vmatprep.subr.mxu0 0.0
          %796 = vmatpush1.msra.mxu0 %v787
          %797 = vmatprep.subr.mxu0 0.0
          %798 = vmatpush1.msra.mxu0 %v788
          %799 = vmatprep.subr.mxu0 0.0
          %800 = vmatpush1.msra.mxu0 %v789
          %801 = vmatprep.subr.mxu0 0.0
          %802 = vmatpush1.msra.mxu0 %v790
          %803 = vmatprep.subr.mxu0 0.0
          %804 = vmatpush1.msra.mxu0 0.0
          %805 = vmatprep.subr.mxu0 0.0
          %806 = vmatpush1.msra.mxu0 0.0
          %807 = vmatprep.subr.mxu0 0.0
          %808 = vmatpush1.msra.mxu0 0.0
          %809 = vmatprep.subr.mxu0 0.0
          %810 = vmatpush1.msra.mxu0 0.0
          %811 = vmatprep.subr.mxu0 0.0
          %812 = vmatpush1.msra.mxu0 0.0
          %813 = vmatprep.subr.mxu0 0.0
          %814 = vmatpush1.msra.mxu0 0.0
          %815 = vmatprep.subr.mxu0 0.0
          %816 = vmatpush1.msra.mxu0 0.0
          %817 = vmatprep.subr.mxu0 0.0
          %818 = vmatpush1.msra.mxu0 0.0
          %819 = vmatprep.subr.mxu0 0.0
          %820 = vmatpush1.msra.mxu0 0.0
          %821 = vmatprep.subr.mxu0 0.0
          %822 = vmatpush1.msra.mxu0 0.0
          %823 = vmatprep.subr.mxu0 0.0
          %824 = vmatpush1.msra.mxu0 0.0
          %825 = vmatprep.subr.mxu0 0.0
          %826 = vmatpush1.msra.mxu0 0.0
          %827 = vmatprep.subr.mxu0 0.0
          %828 = vmatpush1.msra.mxu0 0.0
          %829 = vmatprep.subr.mxu0 0.0
          %830 = vmatpush1.msra.mxu0 0.0
          %831 = vmatprep.subr.mxu0 0.0
          %832 = vmatpush1.msra.mxu0 0.0
          %833 = vmatprep.subr.mxu0 0.0
          %834 = vmatpush1.msra.mxu0 0.0
          %835 = vmatprep.subr.mxu0 0.0
          %836 = vmatpush1.msra.mxu0 0.0
          %837 = vmatprep.subr.mxu0 0.0
          %838 = vmatpush1.msra.mxu0 0.0
          %839 = vmatprep.subr.mxu0 0.0
          %840 = vmatpush1.msra.mxu0 0.0
          %841 = vmatprep.subr.mxu0 0.0
          %842 = vmatpush1.msra.mxu0 0.0
          %843 = vmatprep.subr.mxu0 0.0
          %844 = vmatpush1.msra.mxu0 0.0
          %845 = vmatprep.subr.mxu0 0.0
          %846 = vmatpush1.msra.mxu0 0.0
          %847 = vmatprep.subr.mxu0 0.0
          %848 = vmatpush1.msra.mxu0 0.0
          %849 = vmatprep.subr.mxu0 0.0
          %850 = vmatpush1.msra.mxu0 0.0
          %851 = vmatprep.subr.mxu0 0.0
          %852 = vmatpush1.msra.mxu0 0.0
          %853 = vmatprep.subr.mxu0 0.0
          %854 = vmatpush1.msra.mxu0 0.0
          %855 = vmatprep.subr.mxu0 0.0
          %856 = vmatpush1.msra.mxu0 0.0
          %857 = vmatprep.subr.mxu0 0.0
          %858 = vmatpush1.msra.mxu0 0.0
          %859 = vmatprep.mubr.f32.mxu0 0.0
          %860 = vmatmul.mubr.f32.gmra.mrb[0].mxu0 %v793
          %v861 = vpop.f32.mrb[0].mxu0
          %v862 = vadd.f32 %v791, %v861
          %v863 = vpop.f32.mrb[0].mxu0
          %864 = vdwg.mxu0
          %v865 = vxor.u32 %v862, 2147483648
          %v866 = vmul.f32 %v865, 1.442695
          %v867 = vpow.pop %v866
          %v868 = vadd.f32 %v867, 1.0
          %v869 = vrcp.pop %v868
          %v870 = vmul.f32 1.0, %v869
          %v871 = vld [vmem:[%s11] sm:$0xff]
          %v872 = vld [vmem:[%s11 + $0x8] sm:$0xff]
          %v873 = vld [vmem:[%s12] sm:$0x1]
          %vm874 = vcmask 130048
          %v876 = vsel %vm874, %v870, 0
          %878 = vmatprep.subr.mxu0 0.0
          %879 = vmatpush1.msra.mxu0 %v871
          %880 = vmatprep.subr.mxu0 0.0
          %881 = vmatpush1.msra.mxu0 %v872
          %882 = vmatprep.subr.mxu0 0.0
          %883 = vmatpush1.msra.mxu0 0.0
          %884 = vmatprep.subr.mxu0 0.0
          %885 = vmatpush1.msra.mxu0 0.0
          %886 = vmatprep.subr.mxu0 0.0
          %887 = vmatpush1.msra.mxu0 0.0
          %888 = vmatprep.subr.mxu0 0.0
          %889 = vmatpush1.msra.mxu0 0.0
          %890 = vmatprep.subr.mxu0 0.0
          %891 = vmatpush1.msra.mxu0 0.0
          %892 = vmatprep.subr.mxu0 0.0
          %893 = vmatpush1.msra.mxu0 0.0
          %894 = vmatprep.subr.mxu0 0.0
          %895 = vmatpush1.msra.mxu0 0.0
          %896 = vmatprep.subr.mxu0 0.0
          %897 = vmatpush1.msra.mxu0 0.0
          %898 = vmatprep.subr.mxu0 0.0
          %899 = vmatpush1.msra.mxu0 0.0
          %900 = vmatprep.subr.mxu0 0.0
          %901 = vmatpush1.msra.mxu0 0.0
          %902 = vmatprep.subr.mxu0 0.0
          %903 = vmatpush1.msra.mxu0 0.0
          %904 = vmatprep.subr.mxu0 0.0
          %905 = vmatpush1.msra.mxu0 0.0
          %906 = vmatprep.subr.mxu0 0.0
          %907 = vmatpush1.msra.mxu0 0.0
          %908 = vmatprep.subr.mxu0 0.0
          %909 = vmatpush1.msra.mxu0 0.0
          %910 = vmatprep.subr.mxu0 0.0
          %911 = vmatpush1.msra.mxu0 0.0
          %912 = vmatprep.subr.mxu0 0.0
          %913 = vmatpush1.msra.mxu0 0.0
          %914 = vmatprep.subr.mxu0 0.0
          %915 = vmatpush1.msra.mxu0 0.0
          %916 = vmatprep.subr.mxu0 0.0
          %917 = vmatpush1.msra.mxu0 0.0
          %918 = vmatprep.subr.mxu0 0.0
          %919 = vmatpush1.msra.mxu0 0.0
          %920 = vmatprep.subr.mxu0 0.0
          %921 = vmatpush1.msra.mxu0 0.0
          %922 = vmatprep.subr.mxu0 0.0
          %923 = vmatpush1.msra.mxu0 0.0
          %924 = vmatprep.subr.mxu0 0.0
          %925 = vmatpush1.msra.mxu0 0.0
          %926 = vmatprep.subr.mxu0 0.0
          %927 = vmatpush1.msra.mxu0 0.0
          %928 = vmatprep.subr.mxu0 0.0
          %929 = vmatpush1.msra.mxu0 0.0
          %930 = vmatprep.subr.mxu0 0.0
          %931 = vmatpush1.msra.mxu0 0.0
          %932 = vmatprep.subr.mxu0 0.0
          %933 = vmatpush1.msra.mxu0 0.0
          %934 = vmatprep.subr.mxu0 0.0
          %935 = vmatpush1.msra.mxu0 0.0
          %936 = vmatprep.subr.mxu0 0.0
          %937 = vmatpush1.msra.mxu0 0.0
          %938 = vmatprep.subr.mxu0 0.0
          %939 = vmatpush1.msra.mxu0 0.0
          %940 = vmatprep.subr.mxu0 0.0
          %941 = vmatpush1.msra.mxu0 0.0
          %942 = vmatprep.mubr.f32.mxu0 0.0
          %943 = vmatmul.mubr.f32.gmra.mrb[0].mxu0 %v876
          %v944 = vpop.f32.mrb[0].mxu0
          %v945 = vadd.f32 %v873, %v944
          %v946 = vpop.f32.mrb[0].mxu0
          %947 = vdwg.mxu0
          %vm948 = vcmask 8192
          %949 = vst.msk [vmem:[%s483] sm:$0x1] %vm948, %v945
          %vm950 = vcmask 253952
          %951 = vst.msk [vmem:[%s489] sm:$0x1] %vm950, %v768
        $region80: #{tpu_custom_call.1} parent=71 // pred_fallthru
          _
        %s952 = sand.u32 %s334, 1
        %s953 = scalar_lea.sflag [#allocation7], %s952
        %s954 = sand.u32 %s334, 1
        %s955 = scalar_lea.vmem [#allocation6], %s954
        %s956 = sand.u32 %s360, 1
        %s957 = scalar_lea.sflag [#allocation9], %s956
        %s958 = sand.u32 %s360, 1
        %s959 = scalar_lea.vmem [#allocation8], %s958
        // Predicated region
        $region81: #{tpu_custom_call.1} parent=71 // pred_check
          %p960 = pneg %p344
        $region82: #{tpu_custom_call.1} parent=71 // pred_check_branch
          %962 = sbr.rel (%p960) target = $region84
        $region83: #{tpu_custom_call.1} parent=71 // pred_region
          %s964 = ssub.s32 16, 16
          %965 = vsyncadd %s953, %s964
          %s966 = smul.addr %s38, 16
          %s967 = scalar_lea.hbm %s13, %s966
          %s969 = sshll.u32 %s955, 4
          %s970 = int_to_ptr.vmem [resolvable:$true] %s969
          %972 = dma.vmem_to_hbm [thread:$0]  %s970, 16, %s967, %s953
        $region84: #{tpu_custom_call.1} parent=71 // pred_fallthru
          _
        // Predicated region
        $region85: #{tpu_custom_call.1} parent=71 // pred_check
          %p973 = pneg %p370
        $region86: #{tpu_custom_call.1} parent=71 // pred_check_branch
          %975 = sbr.rel (%p973) target = $region88
        $region87: #{tpu_custom_call.1} parent=71 // pred_region
          %s977 = ssub.s32 16, 16
          %978 = vsyncadd %s957, %s977
          %s979 = smul.addr %s38, 16
          %s980 = scalar_lea.hbm %s14, %s979
          %s982 = sshll.u32 %s959, 4
          %s983 = int_to_ptr.vmem [resolvable:$true] %s982
          %985 = dma.vmem_to_hbm [thread:$0]  %s983, 16, %s980, %s957
        $region88: #{tpu_custom_call.1} parent=71 // pred_fallthru
          _
      $region72: #{tpu_custom_call.1} parent=5 // pred_fallthru
        _
      %p986 = scmp.le.s32.totalorder 2, %s29
      // Predicated region
      $region89: #{tpu_custom_call.1} parent=5 // pred_check
        %p987 = pneg %p986
      $region90: #{tpu_custom_call.1} parent=5 // pred_check_branch
        %989 = sbr.rel (%p987) target = $region92
      $region91: #{tpu_custom_call.1} parent=5 // pred_region
        %s990 = ssub.s32 %s29, 2
        // Predicated region
        $region93: #{tpu_custom_call.1} parent=91 // pred_check
          %p991 = pneg %p350
        $region94: #{tpu_custom_call.1} parent=91 // pred_check_branch
          %993 = sbr.rel (%p991) target = $region96
        $region95: #{tpu_custom_call.1} parent=91 // pred_region
          %s994 = sand.u32 %s335, 1
          %s995 = scalar_lea.sflag [#allocation7], %s994
          %s996 = sand.u32 %s335, 1
          %s997 = scalar_lea.vmem [#allocation6], %s996
          %998 = dma.done %s995, 16
        $region96: #{tpu_custom_call.1} parent=91 // pred_fallthru
          _
        // Predicated region
        $region97: #{tpu_custom_call.1} parent=91 // pred_check
          %p999 = pneg %p376
        $region98: #{tpu_custom_call.1} parent=91 // pred_check_branch
          %1001 = sbr.rel (%p999) target = $region100
        $region99: #{tpu_custom_call.1} parent=91 // pred_region
          %s1002 = sand.u32 %s361, 1
          %s1003 = scalar_lea.sflag [#allocation9], %s1002
          %s1004 = sand.u32 %s361, 1
          %s1005 = scalar_lea.vmem [#allocation8], %s1004
          %1006 = dma.done %s1003, 16
        $region100: #{tpu_custom_call.1} parent=91 // pred_fallthru
          _
      $region92: #{tpu_custom_call.1} parent=5 // pred_fallthru
        _
    $region6: #{tpu_custom_call.1} parent=1 // loop_footer
      %s33 = sadd.s32 1, %s29
    $region7: #{tpu_custom_call.1} parent=1 // loop_footer_branch
      %28 = sbr.rel target = $region3
    $region8: #{tpu_custom_call.1} parent=1 // loop_exit
      _
    %1007 = vsyncpa [#allocation7], 1
    %s1008 = scalar_lea.sflag [#allocation7], 1
    %1009 = vsyncpa %s1008, 1
    %1010 = vsyncpa [#allocation9], 1
    %s1011 = scalar_lea.sflag [#allocation9], 1
    %1012 = vsyncpa %s1011, 1

// kernel: tpu_custom_call.1
$region0: #{tpu_custom_call.1}
  #allocation0 [shape = 'u32[]', space=smem, size = 0x4, offset = 0x4, fixed_abs, tag = 'smem constant byte address 0x4 - core index']
  #allocation1 [shape = 'u32[144,128]{1,0:T(1,128)}', space=vmem, size = 0x12000, scoped, tag = 'internal scratch']
  #allocation2 [shape = 'f32[1,1]{1,0:T(1,128)}', space=vmem, size = 0x200, scoped, tag = 'scratch operand']
  #allocation3 [shape = 'f32[1,1]{1,0:T(1,128)}', space=vmem, size = 0x200, scoped, tag = 'scratch operand']
  #allocation4 [shape = 'f32[8,32]{1,0:T(8,128)}', space=vmem, size = 0x1000, scoped, tag = 'scratch operand']
  #allocation5 [shape = 'f32[1,1]{1,0:T(1,128)S(1)}', space=vmem, size = 0x200, scoped, tag = 'scoped memory for tpu_custom_call.1']
  %s0 = inlined_call_operand.vmem [shape: bf16[2,8,64], index: 0, kind: input, shape index: {}]
  %s1 = inlined_call_operand.vmem [shape: bf16[64,32], index: 1, kind: input, shape index: {}]
  %s2 = inlined_call_operand.vmem [shape: f32[1,32], index: 2, kind: input, shape index: {}]
  %s3 = inlined_call_operand.vmem [shape: bf16[32,64], index: 3, kind: input, shape index: {}]
  %s4 = inlined_call_operand.vmem [shape: f32[1,64], index: 4, kind: input, shape index: {}]
  %s5 = inlined_call_operand.vmem [shape: f32[1,32], index: 5, kind: input, shape index: {}]
  %s6 = inlined_call_operand.<no memory space> [shape: f32[1,1], index: 6, kind: input, shape index: {}]
  %s7 = inlined_call_operand.vmem [shape: f32[1,32], index: 7, kind: input, shape index: {}]
  %s8 = inlined_call_operand.vmem [shape: f32[1,32], index: 8, kind: input, shape index: {}]
  %s9 = inlined_call_operand.vmem [shape: f32[32,16], index: 9, kind: input, shape index: {}]
  %s10 = inlined_call_operand.vmem [shape: f32[1,16], index: 10, kind: input, shape index: {}]
  %s11 = inlined_call_operand.vmem [shape: f32[16,2], index: 11, kind: input, shape index: {}]
  %s12 = inlined_call_operand.vmem [shape: f32[1,2], index: 12, kind: input, shape index: {}]
  %s13 = inlined_call_operand.hbm [shape: f32[2,1,2], index: 13, kind: output, shape index: {0}]
  %s14 = inlined_call_operand.hbm [shape: f32[2,1,32], index: 14, kind: output, shape index: {1}]
  %15 = xla_tuple %s13, %s14
  %s16 = sld [smem:[#allocation0]]
  $region101: #{tpu_custom_call.1} parent=0
    _
  %s18 = ssub.s32 1, %s16
  %s19 = scalar_select 0, %s18, %s16
  %v20 = vstv %s6
  %21 = vst [vmem:[#allocation5] sm:$0x1] %v20
  $region1: #{tpu_custom_call.1} parent=0
    #allocation6 [shape = 'u8[1024]{0}', space=vmem, size = 0x400, scoped, tag = 'output window, operand 0']
    #allocation7 [shape = 's32[2]{0}', space=sflag, size = 0x8, scoped, tag = 'scoped memory for tpu_custom_call.1']
    #allocation8 [shape = 'u8[1024]{0}', space=vmem, size = 0x400, scoped, tag = 'output window, operand 1']
    #allocation9 [shape = 's32[2]{0}', space=sflag, size = 0x8, scoped, tag = 'scoped memory for tpu_custom_call.1']
    %22 = vsyncpa [#allocation7], 0
    %s23 = scalar_lea.sflag [#allocation7], 1
    %24 = vsyncpa %s23, 0
    %25 = vsyncpa [#allocation9], 0
    %s26 = scalar_lea.sflag [#allocation9], 1
    %27 = vsyncpa %s26, 0
    loop: start=0, step=1, limit=4
    $region2: #{tpu_custom_call.1} parent=1 // loop_pre_header
      _
    $region3: #{tpu_custom_call.1} parent=1 // loop_header
      %s29 = sphi 0, %s33
      %p30 = scmp.ge.s32.totalorder %s29, 4
      %s36 = sphi 0, %s48
      %s37 = sphi 0, %s44
      %s38 = sphi 0, %s36
      %s39 = sphi 0, %s37
      %s40 = sphi 0, %s38
      %s41 = sphi 0, %s39
      %s53 = sphi 0, %s55
      %s56 = sphi 0, %s53
      %s57 = sphi 0, %s56
      %s73 = sphi 0, %s57
      %s77 = sphi 0, %s77
      %s79 = sphi 0, %s77
      %s80 = sphi 0, %s79
      %s94 = sphi 0, %s80
      %s98 = sphi 0, %s98
      %s100 = sphi 0, %s98
      %s101 = sphi 0, %s100
      %s115 = sphi 0, %s101
      %s119 = sphi 0, %s119
      %s121 = sphi 0, %s119
      %s122 = sphi 0, %s121
      %s136 = sphi 0, %s122
      %s140 = sphi 0, %s140
      %s142 = sphi 0, %s140
      %s143 = sphi 0, %s142
      %s157 = sphi 0, %s143
      %s161 = sphi 0, %s161
      %s163 = sphi 0, %s161
      %s164 = sphi 0, %s163
      %s178 = sphi 0, %s164
      %s182 = sphi 0, %s182
      %s184 = sphi 0, %s182
      %s185 = sphi 0, %s184
      %s199 = sphi 0, %s185
      %s203 = sphi 0, %s203
      %s205 = sphi 0, %s203
      %s206 = sphi 0, %s205
      %s220 = sphi 0, %s206
      %s224 = sphi 0, %s224
      %s226 = sphi 0, %s224
      %s227 = sphi 0, %s226
      %s241 = sphi 0, %s227
      %s245 = sphi 0, %s245
      %s247 = sphi 0, %s245
      %s248 = sphi 0, %s247
      %s262 = sphi 0, %s248
      %s266 = sphi 0, %s266
      %s268 = sphi 0, %s266
      %s269 = sphi 0, %s268
      %s283 = sphi 0, %s269
      %s287 = sphi 0, %s287
      %s289 = sphi 0, %s287
      %s290 = sphi 0, %s289
      %s304 = sphi 0, %s290
      %s308 = sphi 0, %s308
      %s310 = sphi 0, %s308
      %s311 = sphi 0, %s310
      %s325 = sphi 0, %s311
      %s331 = sphi 0, %s333
      %s334 = sphi 0, %s331
      %s335 = sphi 0, %s334
      %s351 = sphi 0, %s335
      %s357 = sphi 0, %s359
      %s360 = sphi 0, %s357
      %s361 = sphi 0, %s360
      %s377 = sphi 0, %s361
    $region4: #{tpu_custom_call.1} parent=1 // loop_header_branch
      %32 = sbr.rel (%p30) target = $region8
    $region5: #{tpu_custom_call.1} parent=1 // loop_body
      %s34 = ssub.s32 %s29, 1
      %s35 = ssub.s32 %s29, 2
      %s42 = sadd.s32 1, %s37
      %p43 = scmp.ge.s32.totalorder %s42, 1
      %s44 = scalar_select %p43, 0, %s42
      %s45 = sadd.s32 1, %s36
      %s46 = scalar_select %p43, %s45, %s36
      %p47 = scmp.ge.s32.totalorder %s46, 2
      %s48 = scalar_select %p47, 0, %s46
      %s49 = ssub.s32 %s36, %s48
      %s50 = ssub.s32 %s37, %s44
      %s51 = sor.u32 %s49, %s50
      %p52 = scmp.eq.s32.totalorder %s51, 0
      %s54 = sadd.s32 %s53, 1
      %s55 = scalar_select %p52, %s53, %s54
      %p58 = pneg %p52
      %p59 = scmp.eq.s32.totalorder %s29, 1
      %p60 = por %p58, %p59
      %p61 = scmp.ne.s32.totalorder %s53, %s56
      %p62 = scmp.eq.s32.totalorder %s29, 0
      %p63 = por %p61, %p62
      %p64 = scmp.ne.s32.totalorder %s53, %s56
      %p65 = scmp.eq.s32.totalorder %s34, 1
      %p66 = por %p64, %p65
      %p67 = scmp.ne.s32.totalorder %s56, %s57
      %p68 = scmp.eq.s32.totalorder %s34, 0
      %p69 = por %p67, %p68
      %p70 = scmp.ne.s32.totalorder %s56, %s57
      %p71 = scmp.eq.s32.totalorder %s35, 1
      %p72 = por %p70, %p71
      %p74 = scmp.ne.s32.totalorder %s57, %s73
      %p75 = scmp.eq.s32.totalorder %s35, 0
      %p76 = por %p74, %p75
      %s78 = sadd.s32 %s77, 1
      %p81 = scmp.eq.s32.totalorder %s29, 1
      %p82 = scmp.ne.s32.totalorder %s77, %s79
      %p83 = scmp.eq.s32.totalorder %s29, 0
      %p84 = por %p82, %p83
      %p85 = scmp.ne.s32.totalorder %s77, %s79
      %p86 = scmp.eq.s32.totalorder %s34, 1
      %p87 = por %p85, %p86
      %p88 = scmp.ne.s32.totalorder %s79, %s80
      %p89 = scmp.eq.s32.totalorder %s34, 0
      %p90 = por %p88, %p89
      %p91 = scmp.ne.s32.totalorder %s79, %s80
      %p92 = scmp.eq.s32.totalorder %s35, 1
      %p93 = por %p91, %p92
      %p95 = scmp.ne.s32.totalorder %s80, %s94
      %p96 = scmp.eq.s32.totalorder %s35, 0
      %p97 = por %p95, %p96
      %s99 = sadd.s32 %s98, 1
      %p102 = scmp.eq.s32.totalorder %s29, 1
      %p103 = scmp.ne.s32.totalorder %s98, %s100
      %p104 = scmp.eq.s32.totalorder %s29, 0
      %p105 = por %p103, %p104
      %p106 = scmp.ne.s32.totalorder %s98, %s100
      %p107 = scmp.eq.s32.totalorder %s34, 1
      %p108 = por %p106, %p107
      %p109 = scmp.ne.s32.totalorder %s100, %s101
      %p110 = scmp.eq.s32.totalorder %s34, 0
      %p111 = por %p109, %p110
      %p112 = scmp.ne.s32.totalorder %s100, %s101
      %p113 = scmp.eq.s32.totalorder %s35, 1
      %p114 = por %p112, %p113
      %p116 = scmp.ne.s32.totalorder %s101, %s115
      %p117 = scmp.eq.s32.totalorder %s35, 0
      %p118 = por %p116, %p117
      %s120 = sadd.s32 %s119, 1
      %p123 = scmp.eq.s32.totalorder %s29, 1
      %p124 = scmp.ne.s32.totalorder %s119, %s121
      %p125 = scmp.eq.s32.totalorder %s29, 0
      %p126 = por %p124, %p125
      %p127 = scmp.ne.s32.totalorder %s119, %s121
      %p128 = scmp.eq.s32.totalorder %s34, 1
      %p129 = por %p127, %p128
      %p130 = scmp.ne.s32.totalorder %s121, %s122
      %p131 = scmp.eq.s32.totalorder %s34, 0
      %p132 = por %p130, %p131
      %p133 = scmp.ne.s32.totalorder %s121, %s122
      %p134 = scmp.eq.s32.totalorder %s35, 1
      %p135 = por %p133, %p134
      %p137 = scmp.ne.s32.totalorder %s122, %s136
      %p138 = scmp.eq.s32.totalorder %s35, 0
      %p139 = por %p137, %p138
      %s141 = sadd.s32 %s140, 1
      %p144 = scmp.eq.s32.totalorder %s29, 1
      %p145 = scmp.ne.s32.totalorder %s140, %s142
      %p146 = scmp.eq.s32.totalorder %s29, 0
      %p147 = por %p145, %p146
      %p148 = scmp.ne.s32.totalorder %s140, %s142
      %p149 = scmp.eq.s32.totalorder %s34, 1
      %p150 = por %p148, %p149
      %p151 = scmp.ne.s32.totalorder %s142, %s143
      %p152 = scmp.eq.s32.totalorder %s34, 0
      %p153 = por %p151, %p152
      %p154 = scmp.ne.s32.totalorder %s142, %s143
      %p155 = scmp.eq.s32.totalorder %s35, 1
      %p156 = por %p154, %p155
      %p158 = scmp.ne.s32.totalorder %s143, %s157
      %p159 = scmp.eq.s32.totalorder %s35, 0
      %p160 = por %p158, %p159
      %s162 = sadd.s32 %s161, 1
      %p165 = scmp.eq.s32.totalorder %s29, 1
      %p166 = scmp.ne.s32.totalorder %s161, %s163
      %p167 = scmp.eq.s32.totalorder %s29, 0
      %p168 = por %p166, %p167
      %p169 = scmp.ne.s32.totalorder %s161, %s163
      %p170 = scmp.eq.s32.totalorder %s34, 1
      %p171 = por %p169, %p170
      %p172 = scmp.ne.s32.totalorder %s163, %s164
      %p173 = scmp.eq.s32.totalorder %s34, 0
      %p174 = por %p172, %p173
      %p175 = scmp.ne.s32.totalorder %s163, %s164
      %p176 = scmp.eq.s32.totalorder %s35, 1
      %p177 = por %p175, %p176
      %p179 = scmp.ne.s32.totalorder %s164, %s178
      %p180 = scmp.eq.s32.totalorder %s35, 0
      %p181 = por %p179, %p180
      %s183 = sadd.s32 %s182, 1
      %p186 = scmp.eq.s32.totalorder %s29, 1
      %p187 = scmp.ne.s32.totalorder %s182, %s184
      %p188 = scmp.eq.s32.totalorder %s29, 0
      %p189 = por %p187, %p188
      %p190 = scmp.ne.s32.totalorder %s182, %s184
      %p191 = scmp.eq.s32.totalorder %s34, 1
      %p192 = por %p190, %p191
      %p193 = scmp.ne.s32.totalorder %s184, %s185
      %p194 = scmp.eq.s32.totalorder %s34, 0
      %p195 = por %p193, %p194
      %p196 = scmp.ne.s32.totalorder %s184, %s185
      %p197 = scmp.eq.s32.totalorder %s35, 1
      %p198 = por %p196, %p197
      %p200 = scmp.ne.s32.totalorder %s185, %s199
      %p201 = scmp.eq.s32.totalorder %s35, 0
      %p202 = por %p200, %p201
      %s204 = sadd.s32 %s203, 1
      %p207 = scmp.eq.s32.totalorder %s29, 1
      %p208 = scmp.ne.s32.totalorder %s203, %s205
      %p209 = scmp.eq.s32.totalorder %s29, 0
      %p210 = por %p208, %p209
      %p211 = scmp.ne.s32.totalorder %s203, %s205
      %p212 = scmp.eq.s32.totalorder %s34, 1
      %p213 = por %p211, %p212
      %p214 = scmp.ne.s32.totalorder %s205, %s206
      %p215 = scmp.eq.s32.totalorder %s34, 0
      %p216 = por %p214, %p215
      %p217 = scmp.ne.s32.totalorder %s205, %s206
      %p218 = scmp.eq.s32.totalorder %s35, 1
      %p219 = por %p217, %p218
      %p221 = scmp.ne.s32.totalorder %s206, %s220
      %p222 = scmp.eq.s32.totalorder %s35, 0
      %p223 = por %p221, %p222
      %s225 = sadd.s32 %s224, 1
      %p228 = scmp.eq.s32.totalorder %s29, 1
      %p229 = scmp.ne.s32.totalorder %s224, %s226
      %p230 = scmp.eq.s32.totalorder %s29, 0
      %p231 = por %p229, %p230
      %p232 = scmp.ne.s32.totalorder %s224, %s226
      %p233 = scmp.eq.s32.totalorder %s34, 1
      %p234 = por %p232, %p233
      %p235 = scmp.ne.s32.totalorder %s226, %s227
      %p236 = scmp.eq.s32.totalorder %s34, 0
      %p237 = por %p235, %p236
      %p238 = scmp.ne.s32.totalorder %s226, %s227
      %p239 = scmp.eq.s32.totalorder %s35, 1
      %p240 = por %p238, %p239
      %p242 = scmp.ne.s32.totalorder %s227, %s241
      %p243 = scmp.eq.s32.totalorder %s35, 0
      %p244 = por %p242, %p243
      %s246 = sadd.s32 %s245, 1
      %p249 = scmp.eq.s32.totalorder %s29, 1
      %p250 = scmp.ne.s32.totalorder %s245, %s247
      %p251 = scmp.eq.s32.totalorder %s29, 0
      %p252 = por %p250, %p251
      %p253 = scmp.ne.s32.totalorder %s245, %s247
      %p254 = scmp.eq.s32.totalorder %s34, 1
      %p255 = por %p253, %p254
      %p256 = scmp.ne.s32.totalorder %s247, %s248
      %p257 = scmp.eq.s32.totalorder %s34, 0
      %p258 = por %p256, %p257
      %p259 = scmp.ne.s32.totalorder %s247, %s248
      %p260 = scmp.eq.s32.totalorder %s35, 1
      %p261 = por %p259, %p260
      %p263 = scmp.ne.s32.totalorder %s248, %s262
      %p264 = scmp.eq.s32.totalorder %s35, 0
      %p265 = por %p263, %p264
      %s267 = sadd.s32 %s266, 1
      %p270 = scmp.eq.s32.totalorder %s29, 1
      %p271 = scmp.ne.s32.totalorder %s266, %s268
      %p272 = scmp.eq.s32.totalorder %s29, 0
      %p273 = por %p271, %p272
      %p274 = scmp.ne.s32.totalorder %s266, %s268
      %p275 = scmp.eq.s32.totalorder %s34, 1
      %p276 = por %p274, %p275
      %p277 = scmp.ne.s32.totalorder %s268, %s269
      %p278 = scmp.eq.s32.totalorder %s34, 0
      %p279 = por %p277, %p278
      %p280 = scmp.ne.s32.totalorder %s268, %s269
      %p281 = scmp.eq.s32.totalorder %s35, 1
      %p282 = por %p280, %p281
      %p284 = scmp.ne.s32.totalorder %s269, %s283
      %p285 = scmp.eq.s32.totalorder %s35, 0
      %p286 = por %p284, %p285
      %s288 = sadd.s32 %s287, 1
      %p291 = scmp.eq.s32.totalorder %s29, 1
      %p292 = scmp.ne.s32.totalorder %s287, %s289
      %p293 = scmp.eq.s32.totalorder %s29, 0
      %p294 = por %p292, %p293
      %p295 = scmp.ne.s32.totalorder %s287, %s289
      %p296 = scmp.eq.s32.totalorder %s34, 1
      %p297 = por %p295, %p296
      %p298 = scmp.ne.s32.totalorder %s289, %s290
      %p299 = scmp.eq.s32.totalorder %s34, 0
      %p300 = por %p298, %p299
      %p301 = scmp.ne.s32.totalorder %s289, %s290
      %p302 = scmp.eq.s32.totalorder %s35, 1
      %p303 = por %p301, %p302
      %p305 = scmp.ne.s32.totalorder %s290, %s304
      %p306 = scmp.eq.s32.totalorder %s35, 0
      %p307 = por %p305, %p306
      %s309 = sadd.s32 %s308, 1
      %p312 = scmp.eq.s32.totalorder %s29, 1
      %p313 = scmp.ne.s32.totalorder %s308, %s310
      %p314 = scmp.eq.s32.totalorder %s29, 0
      %p315 = por %p313, %p314
      %p316 = scmp.ne.s32.totalorder %s308, %s310
      %p317 = scmp.eq.s32.totalorder %s34, 1
      %p318 = por %p316, %p317
      %p319 = scmp.ne.s32.totalorder %s310, %s311
      %p320 = scmp.eq.s32.totalorder %s34, 0
      %p321 = por %p319, %p320
      %p322 = scmp.ne.s32.totalorder %s310, %s311
      %p323 = scmp.eq.s32.totalorder %s35, 1
      %p324 = por %p322, %p323
      %p326 = scmp.ne.s32.totalorder %s311, %s325
      %p327 = scmp.eq.s32.totalorder %s35, 0
      %p328 = por %p326, %p327
      %s329 = ssub.s32 %s36, %s48
      %p330 = scmp.eq.s32.totalorder %s329, 0
      %s332 = sadd.s32 %s331, 1
      %s333 = scalar_select %p330, %s331, %s332
      %p336 = pneg %p330
      %p337 = scmp.eq.s32.totalorder %s29, 1
      %p338 = por %p336, %p337
      %p339 = scmp.ne.s32.totalorder %s331, %s334
      %p340 = scmp.eq.s32.totalorder %s29, 0
      %p341 = por %p339, %p340
      %p342 = scmp.ne.s32.totalorder %s331, %s334
      %p343 = scmp.eq.s32.totalorder %s34, 1
      %p344 = por %p342, %p343
      %p345 = scmp.ne.s32.totalorder %s334, %s335
      %p346 = scmp.eq.s32.totalorder %s34, 0
      %p347 = por %p345, %p346
      %p348 = scmp.ne.s32.totalorder %s334, %s335
      %p349 = scmp.eq.s32.totalorder %s35, 1
      %p350 = por %p348, %p349
      %p352 = scmp.ne.s32.totalorder %s335, %s351
      %p353 = scmp.eq.s32.totalorder %s35, 0
      %p354 = por %p352, %p353
      %s355 = ssub.s32 %s36, %s48
      %p356 = scmp.eq.s32.totalorder %s355, 0
      %s358 = sadd.s32 %s357, 1
      %s359 = scalar_select %p356, %s357, %s358
      %p362 = pneg %p356
      %p363 = scmp.eq.s32.totalorder %s29, 1
      %p364 = por %p362, %p363
      %p365 = scmp.ne.s32.totalorder %s357, %s360
      %p366 = scmp.eq.s32.totalorder %s29, 0
      %p367 = por %p365, %p366
      %p368 = scmp.ne.s32.totalorder %s357, %s360
      %p369 = scmp.eq.s32.totalorder %s34, 1
      %p370 = por %p368, %p369
      %p371 = scmp.ne.s32.totalorder %s360, %s361
      %p372 = scmp.eq.s32.totalorder %s34, 0
      %p373 = por %p371, %p372
      %p374 = scmp.ne.s32.totalorder %s360, %s361
      %p375 = scmp.eq.s32.totalorder %s35, 1
      %p376 = por %p374, %p375
      %p378 = scmp.ne.s32.totalorder %s361, %s377
      %p379 = scmp.eq.s32.totalorder %s35, 0
      %p380 = por %p378, %p379
      %p381 = scmp.le.s32.totalorder 1, %s29
      %p382 = scmp.lt.s32.totalorder %s29, 3
      %p383 = pnand %p381, %p382
      %p384 = pneg %p383
      // Predicated region
      $region9: #{tpu_custom_call.1} parent=5 // pred_check
        _
      $region10: #{tpu_custom_call.1} parent=5 // pred_check_branch
        %386 = sbr.rel (%p383) target = $region12
      $region11: #{tpu_custom_call.1} parent=5 // pred_region
        %s387 = ssub.s32 %s29, 1
        // Predicated region
        $region13: #{tpu_custom_call.1} parent=11 // pred_check
          %p388 = pneg %p90
        $region14: #{tpu_custom_call.1} parent=11 // pred_check_branch
          %390 = sbr.rel (%p388) target = $region16
        $region15: #{tpu_custom_call.1} parent=11 // pred_region
          _
        $region16: #{tpu_custom_call.1} parent=11 // pred_fallthru
          _
        // Predicated region
        $region17: #{tpu_custom_call.1} parent=11 // pred_check
          %p391 = pneg %p111
        $region18: #{tpu_custom_call.1} parent=11 // pred_check_branch
          %393 = sbr.rel (%p391) target = $region20
        $region19: #{tpu_custom_call.1} parent=11 // pred_region
          _
        $region20: #{tpu_custom_call.1} parent=11 // pred_fallthru
          _
        // Predicated region
        $region21: #{tpu_custom_call.1} parent=11 // pred_check
          %p394 = pneg %p132
        $region22: #{tpu_custom_call.1} parent=11 // pred_check_branch
          %396 = sbr.rel (%p394) target = $region24
        $region23: #{tpu_custom_call.1} parent=11 // pred_region
          _
        $region24: #{tpu_custom_call.1} parent=11 // pred_fallthru
          _
        // Predicated region
        $region25: #{tpu_custom_call.1} parent=11 // pred_check
          %p397 = pneg %p153
        $region26: #{tpu_custom_call.1} parent=11 // pred_check_branch
          %399 = sbr.rel (%p397) target = $region28
        $region27: #{tpu_custom_call.1} parent=11 // pred_region
          _
        $region28: #{tpu_custom_call.1} parent=11 // pred_fallthru
          _
        // Predicated region
        $region29: #{tpu_custom_call.1} parent=11 // pred_check
          %p400 = pneg %p174
        $region30: #{tpu_custom_call.1} parent=11 // pred_check_branch
          %402 = sbr.rel (%p400) target = $region32
        $region31: #{tpu_custom_call.1} parent=11 // pred_region
          _
        $region32: #{tpu_custom_call.1} parent=11 // pred_fallthru
          _
        // Predicated region
        $region33: #{tpu_custom_call.1} parent=11 // pred_check
          %p403 = pneg %p195
        $region34: #{tpu_custom_call.1} parent=11 // pred_check_branch
          %405 = sbr.rel (%p403) target = $region36
        $region35: #{tpu_custom_call.1} parent=11 // pred_region
          _
        $region36: #{tpu_custom_call.1} parent=11 // pred_fallthru
          _
        // Predicated region
        $region37: #{tpu_custom_call.1} parent=11 // pred_check
          %p406 = pneg %p216
        $region38: #{tpu_custom_call.1} parent=11 // pred_check_branch
          %408 = sbr.rel (%p406) target = $region40
        $region39: #{tpu_custom_call.1} parent=11 // pred_region
          _
        $region40: #{tpu_custom_call.1} parent=11 // pred_fallthru
          _
        // Predicated region
        $region41: #{tpu_custom_call.1} parent=11 // pred_check
          %p409 = pneg %p237
        $region42: #{tpu_custom_call.1} parent=11 // pred_check_branch
          %411 = sbr.rel (%p409) target = $region44
        $region43: #{tpu_custom_call.1} parent=11 // pred_region
          _
        $region44: #{tpu_custom_call.1} parent=11 // pred_fallthru
          _
        // Predicated region
        $region45: #{tpu_custom_call.1} parent=11 // pred_check
          %p412 = pneg %p258
        $region46: #{tpu_custom_call.1} parent=11 // pred_check_branch
          %414 = sbr.rel (%p412) target = $region48
        $region47: #{tpu_custom_call.1} parent=11 // pred_region
          _
        $region48: #{tpu_custom_call.1} parent=11 // pred_fallthru
          _
        // Predicated region
        $region49: #{tpu_custom_call.1} parent=11 // pred_check
          %p415 = pneg %p279
        $region50: #{tpu_custom_call.1} parent=11 // pred_check_branch
          %417 = sbr.rel (%p415) target = $region52
        $region51: #{tpu_custom_call.1} parent=11 // pred_region
          _
        $region52: #{tpu_custom_call.1} parent=11 // pred_fallthru
          _
        // Predicated region
        $region53: #{tpu_custom_call.1} parent=11 // pred_check
          %p418 = pneg %p300
        $region54: #{tpu_custom_call.1} parent=11 // pred_check_branch
          %420 = sbr.rel (%p418) target = $region56
        $region55: #{tpu_custom_call.1} parent=11 // pred_region
          _
        $region56: #{tpu_custom_call.1} parent=11 // pred_fallthru
          _
        // Predicated region
        $region57: #{tpu_custom_call.1} parent=11 // pred_check
          %p421 = pneg %p321
        $region58: #{tpu_custom_call.1} parent=11 // pred_check_branch
          %423 = sbr.rel (%p421) target = $region60
        $region59: #{tpu_custom_call.1} parent=11 // pred_region
          _
        $region60: #{tpu_custom_call.1} parent=11 // pred_fallthru
          _
      $region12: #{tpu_custom_call.1} parent=5 // pred_fallthru
        _
      %p424 = scmp.lt.s32.totalorder %s29, 2
      // Predicated region
      $region61: #{tpu_custom_call.1} parent=5 // pred_check
        %p425 = pneg %p424
      $region62: #{tpu_custom_call.1} parent=5 // pred_check_branch
        %427 = sbr.rel (%p425) target = $region64
      $region63: #{tpu_custom_call.1} parent=5 // pred_region
        // Predicated region
        $region65: #{tpu_custom_call.1} parent=63 // pred_check
          %p428 = pneg %p63
        $region66: #{tpu_custom_call.1} parent=63 // pred_check_branch
          %430 = sbr.rel (%p428) target = $region68
        $region67: #{tpu_custom_call.1} parent=63 // pred_region
          %p431 = scmp.lt.s32.totalorder %s36, 1
          %s432 = scalar_select %p431, %s36, 1
          %p433 = scmp.lt.s32.totalorder %s37, 0
          %s434 = scalar_select %p433, %s37, 0
          %s435 = sadd.s32 %s434, %s432
          %s436 = smul.addr %s435, 4
          %s437 = scalar_lea.vmem %s0, %s436
        $region68: #{tpu_custom_call.1} parent=63 // pred_fallthru
          _
      $region64: #{tpu_custom_call.1} parent=5 // pred_fallthru
        _
      %p438 = scmp.le.s32.totalorder 1, %s29
      %p439 = scmp.lt.s32.totalorder %s29, 3
      %p440 = pnand %p438, %p439
      %p441 = pneg %p440
      // Predicated region
      $region69: #{tpu_custom_call.1} parent=5 // pred_check
        _
      $region70: #{tpu_custom_call.1} parent=5 // pred_check_branch
        %443 = sbr.rel (%p440) target = $region72
      $region71: #{tpu_custom_call.1} parent=5 // pred_region
        %s444 = ssub.s32 %s29, 1
        %p445 = scmp.lt.s32.totalorder %s38, 1
        %s446 = scalar_select %p445, %s38, 1
        %p447 = scmp.lt.s32.totalorder %s39, 0
        %s448 = scalar_select %p447, %s39, 0
        %s449 = sadd.s32 %s448, %s446
        %s450 = smul.addr %s449, 4
        %s451 = scalar_lea.vmem %s0, %s450
        %p452 = pneg %p69
        %p453 = pneg %p66
        %p454 = pneg %p90
        %p455 = pneg %p87
        %p456 = pneg %p111
        %p457 = pneg %p108
        %p458 = pneg %p132
        %p459 = pneg %p129
        %p460 = pneg %p153
        %p461 = pneg %p150
        %p462 = pneg %p174
        %p463 = pneg %p171
        %p464 = pneg %p195
        %p465 = pneg %p192
        %p466 = pneg %p216
        %p467 = pneg %p213
        %p468 = pneg %p237
        %p469 = pneg %p234
        %p470 = pneg %p258
        %p471 = pneg %p255
        %p472 = pneg %p279
        %p473 = pneg %p276
        %p474 = pneg %p300
        %p475 = pneg %p297
        %p476 = pneg %p321
        %p477 = pneg %p318
        %p478 = pneg %p347
        %p479 = pneg %p344
        %s480 = sand.u32 %s334, 1
        %s481 = scalar_lea.sflag [#allocation7], %s480
        %s482 = sand.u32 %s334, 1
        %s483 = scalar_lea.vmem [#allocation6], %s482
        %p484 = pneg %p373
        %p485 = pneg %p370
        %s486 = sand.u32 %s360, 1
        %s487 = scalar_lea.sflag [#allocation9], %s486
        %s488 = sand.u32 %s360, 1
        %s489 = scalar_lea.vmem [#allocation8], %s488
        %p490 = scmp.lt.s32.totalorder %s38, 1
        %s491 = scalar_select %p490, %s38, 1
        %p492 = scmp.lt.s32.totalorder %s39, 0
        %s493 = scalar_select %p492, %s39, 0
        %s494 = sadd.s32 %s493, %s491
        %s495 = smul.addr %s494, 4
        %s496 = scalar_lea.vmem %s0, %s495
        %p498 = scmp.eq.s32.totalorder %s39, 0
        // Predicated region
        $region73: #{tpu_custom_call.1} parent=71 // pred_check
          %p499 = pneg %p498
        $region74: #{tpu_custom_call.1} parent=71 // pred_check_branch
          %501 = sbr.rel (%p499) target = $region76
        $region75: #{tpu_custom_call.1} parent=71 // pred_region
          %vm502 = vcmask 0
          %503 = vst.msk [vmem:[#allocation2] sm:$0x1] %vm502, -inf
          %504 = vst.msk [vmem:[#allocation3] sm:$0x1] %vm502, 0.0
          %vm505 = vcmask 261120
          %506 = vst.msk [vmem:[#allocation4] sm:$0xff] %vm505, 0.0
        $region76: #{tpu_custom_call.1} parent=71 // pred_fallthru
          _
        %v507 = vld [vmem:[%s496] sm:$0xf]
        %v508 = vld [vmem:[%s1] sm:$0xf]
        %v509 = vld [vmem:[%s1 + $0x4] sm:$0xf]
        %v510 = vld [vmem:[%s1 + $0x8] sm:$0xf]
        %v511 = vld [vmem:[%s1 + $0xc] sm:$0xf]
        %v512 = vld [vmem:[%s1 + $0x10] sm:$0xf]
        %v513 = vld [vmem:[%s1 + $0x14] sm:$0xf]
        %v514 = vld [vmem:[%s1 + $0x18] sm:$0xf]
        %v515 = vld [vmem:[%s1 + $0x1c] sm:$0xf]
        %v516 = vld [vmem:[%s2] sm:$0x1]
        %v518 = vlaneseq
        %v519 = vshrl.u32 %v518, 7
        %v520 = vsub.s32 0, %v519
        %v521 = vrot.slane %v516, %v520
        %v531 = vunpack.c.l.b16 %v508
        %v532 = vunpack.c.l.b16 %v509
        %v533 = vunpack.c.l.b16 %v510
        %v534 = vunpack.c.l.b16 %v511
        %v535 = vunpack.c.l.b16 %v512
        %v536 = vunpack.c.l.b16 %v513
        %v537 = vunpack.c.l.b16 %v514
        %v538 = vunpack.c.l.b16 %v515
        %v539 = vpack.c.b16 %v532, %v531
        %v540 = vpack.c.b16 %v534, %v533
        %v541 = vpack.c.b16 %v536, %v535
        %v542 = vpack.c.b16 %v538, %v537
        %vm547 = vcmask 523264
        %v549 = vsel %vm547, %v507, 0
        %551 = vmatprep.subr.bf16.mxu0 0
        %552 = vmatpush1.bf16.msra.mxu0 %v539
        %553 = vmatprep.subr.bf16.mxu0 0
        %554 = vmatpush1.bf16.msra.mxu0 %v540
        %555 = vmatprep.subr.bf16.mxu0 0
        %556 = vmatpush1.bf16.msra.mxu0 %v541
        %557 = vmatprep.subr.bf16.mxu0 0
        %558 = vmatpush1.bf16.msra.mxu0 %v542
        %559 = vmatprep.subr.bf16.mxu0 0
        %560 = vmatpush1.bf16.msra.mxu0 0
        %561 = vmatprep.subr.bf16.mxu0 0
        %562 = vmatpush1.bf16.msra.mxu0 0
        %563 = vmatprep.subr.bf16.mxu0 0
        %564 = vmatpush1.bf16.msra.mxu0 0
        %565 = vmatprep.subr.bf16.mxu0 0
        %566 = vmatpush1.bf16.msra.mxu0 0
        %567 = vmatprep.subr.bf16.mxu0 0
        %568 = vmatpush1.bf16.msra.mxu0 0
        %569 = vmatprep.subr.bf16.mxu0 0
        %570 = vmatpush1.bf16.msra.mxu0 0
        %571 = vmatprep.subr.bf16.mxu0 0
        %572 = vmatpush1.bf16.msra.mxu0 0
        %573 = vmatprep.subr.bf16.mxu0 0
        %574 = vmatpush1.bf16.msra.mxu0 0
        %575 = vmatprep.subr.bf16.mxu0 0
        %576 = vmatpush1.bf16.msra.mxu0 0
        %577 = vmatprep.subr.bf16.mxu0 0
        %578 = vmatpush1.bf16.msra.mxu0 0
        %579 = vmatprep.subr.bf16.mxu0 0
        %580 = vmatpush1.bf16.msra.mxu0 0
        %581 = vmatprep.subr.bf16.mxu0 0
        %582 = vmatpush1.bf16.msra.mxu0 0
        %583 = vmatprep.mubr.bf16.mxu0 0
        %584 = vmatmul.mubr.bf16.gmra.mrb[0].mxu0 %v549
        %v585 = vpop.f32.mrb[0].mxu0
        %v586 = vadd.f32 %v521, %v585
        %v587 = vpop.f32.mrb[0].mxu0
        %v588 = vpop.f32.mrb[0].mxu0
        %v589 = vpop.f32.mrb[0].mxu0
        %590 = vdwg.mxu0
        %v591 = vmax.f32 %v586, 0.0
        %v592 = vpack.c.bf16 %v591, %v591
        %v593 = vld [vmem:[%s3] sm:$0xf]
        %v594 = vld [vmem:[%s3 + $0x4] sm:$0xf]
        %v595 = vld [vmem:[%s3 + $0x8] sm:$0xf]
        %v596 = vld [vmem:[%s3 + $0xc] sm:$0xf]
        %v597 = vld [vmem:[%s4] sm:$0x1]
        %v599 = vlaneseq
        %v600 = vshrl.u32 %v599, 7
        %v601 = vsub.s32 0, %v600
        %v602 = vrot.slane %v597, %v601
        %v608 = vunpack.c.l.b16 %v593
        %v609 = vunpack.c.l.b16 %v594
        %v610 = vunpack.c.l.b16 %v595
        %v611 = vunpack.c.l.b16 %v596
        %v612 = vpack.c.b16 %v609, %v608
        %v613 = vpack.c.b16 %v611, %v610
        %vm616 = vcmask 261120
        %v618 = vsel %vm616, %v592, 0
        %620 = vmatprep.subr.bf16.mxu0 0
        %621 = vmatpush1.bf16.msra.mxu0 %v612
        %622 = vmatprep.subr.bf16.mxu0 0
        %623 = vmatpush1.bf16.msra.mxu0 %v613
        %624 = vmatprep.subr.bf16.mxu0 0
        %625 = vmatpush1.bf16.msra.mxu0 0
        %626 = vmatprep.subr.bf16.mxu0 0
        %627 = vmatpush1.bf16.msra.mxu0 0
        %628 = vmatprep.subr.bf16.mxu0 0
        %629 = vmatpush1.bf16.msra.mxu0 0
        %630 = vmatprep.subr.bf16.mxu0 0
        %631 = vmatpush1.bf16.msra.mxu0 0
        %632 = vmatprep.subr.bf16.mxu0 0
        %633 = vmatpush1.bf16.msra.mxu0 0
        %634 = vmatprep.subr.bf16.mxu0 0
        %635 = vmatpush1.bf16.msra.mxu0 0
        %636 = vmatprep.subr.bf16.mxu0 0
        %637 = vmatpush1.bf16.msra.mxu0 0
        %638 = vmatprep.subr.bf16.mxu0 0
        %639 = vmatpush1.bf16.msra.mxu0 0
        %640 = vmatprep.subr.bf16.mxu0 0
        %641 = vmatpush1.bf16.msra.mxu0 0
        %642 = vmatprep.subr.bf16.mxu0 0
        %643 = vmatpush1.bf16.msra.mxu0 0
        %644 = vmatprep.subr.bf16.mxu0 0
        %645 = vmatpush1.bf16.msra.mxu0 0
        %646 = vmatprep.subr.bf16.mxu0 0
        %647 = vmatpush1.bf16.msra.mxu0 0
        %648 = vmatprep.subr.bf16.mxu0 0
        %649 = vmatpush1.bf16.msra.mxu0 0
        %650 = vmatprep.subr.bf16.mxu0 0
        %651 = vmatpush1.bf16.msra.mxu0 0
        %652 = vmatprep.mubr.bf16.mxu0 0
        %653 = vmatmul.mubr.bf16.gmra.mrb[0].mxu0 %v618
        %v654 = vpop.f32.mrb[0].mxu0
        %v655 = vadd.f32 %v602, %v654
        %v656 = vpop.f32.mrb[0].mxu0
        %v657 = vpop.f32.mrb[0].mxu0
        %v658 = vpop.f32.mrb[0].mxu0
        %659 = vdwg.mxu0
        %v660 = vtanh.pop %v655
        %v661 = vxor.u32 %v655, 2147483648
        %v662 = vmul.f32 %v661, 1.442695
        %v663 = vpow.pop %v662
        %v664 = vadd.f32 %v663, 1.0
        %v665 = vrcp.pop %v664
        %v666 = vmul.f32 1.0, %v665
        %668 = vrot.lane.b32.xlu0 %v666, 96
        %v669 = vpop.permute.xlu0 %668
        %v671 = vmul.f32 %v660, %v669
        %v672 = vld [vmem:[%s5] sm:$0x1]
        %v674 = vlaneseq
        %v675 = vshrl.u32 %v674, 7
        %v676 = vsub.s32 0, %v675
        %v677 = vrot.slane %v672, %v676
        %v679 = vmul.f32 %v671, %v677
        %v680 = vsel %vm616, %v679, 0.0
        %681 = vadd.xlane.f32.xlu0 %v680
        %v682 = vpop.xlane.xlu0 %681
        %v683 = vld [vmem:[#allocation5] sm:$0x1]
        %v685 = vlaneseq
        %v686 = vshrl.u32 %v685, 7
        %v687 = vsub.s32 0, %v686
        %v688 = vrot.slane %v683, %v687
        %v690 = vadd.f32 %v682, %v688
        %v691 = vld [vmem:[#allocation2] sm:$0x1]
        %vm692 = vcmask 7168
        %v693 = vsel %vm692, %v690, -inf
        %v694 = vrot.slane %v693, 4
        %v695 = vmax.f32 %v693, %v694
        %v696 = vrot.slane %v695, 2
        %v697 = vmax.f32 %v695, %v696
        %v698 = vrot.slane %v697, 1
        %v699 = vmax.f32 %v697, %v698
        %v700 = vmax.f32 %v691, %v699
        %v701 = vsub.f32 %v691, %v700
        %v702 = vmul.f32 %v701, 1.442695
        %v703 = vpow.pop %v702
        %v705 = vlaneseq
        %v706 = vshrl.u32 %v705, 7
        %v707 = vsub.s32 0, %v706
        %v708 = vrot.slane %v700, %v707
        %v710 = vsub.f32 %v690, %v708
        %v711 = vmul.f32 %v710, 1.442695
        %v712 = vpow.pop %v711
        %v713 = vld [vmem:[#allocation3] sm:$0x1]
        %v714 = vmul.f32 %v703, %v713
        %v715 = vsel %vm692, %v712, 0.0
        %v716 = vrot.slane %v715, 4
        %v717 = vadd.f32 %v715, %v716
        %v718 = vrot.slane %v717, 2
        %v719 = vadd.f32 %v717, %v718
        %v720 = vrot.slane %v719, 1
        %v721 = vadd.f32 %v719, %v720
        %v722 = vadd.f32 %v714, %v721
        %vm723 = vcmask 0
        %724 = vst.msk [vmem:[#allocation3] sm:$0x1] %vm723, %v722
        %726 = vset.pattern.permute.xlu0 0
        %727 = vperm.xlu0 %726, %v712
        %v728 = vpop.permute.xlu0 %727
        %v730 = vmul.f32 %v728, %v591
        %v731 = vadd.f32 %v730, 0.0
        %v732 = vld [vmem:[#allocation4] sm:$0xff]
        %v734 = vlaneseq
        %v735 = vshrl.u32 %v734, 7
        %v736 = vsub.s32 0, %v735
        %v737 = vrot.slane %v703, %v736
        %738 = vset.pattern.permute.xlu0 0
        %739 = vperm.xlu0 %738, %v737
        %v740 = vpop.permute.xlu0 %739
        %v742 = vmul.f32 %v740, %v732
        %v743 = vadd.f32 %v742, %v731
        %744 = vst.msk [vmem:[#allocation4] sm:$0xff] %vm616, %v743
        %745 = vst.msk [vmem:[#allocation2] sm:$0x1] %vm723, %v700
        // Predicated region
        $region77: #{tpu_custom_call.1} parent=71 // pred_check
          %p746 = pneg %p498
        $region78: #{tpu_custom_call.1} parent=71 // pred_check_branch
          %748 = sbr.rel (%p746) target = $region80
        $region79: #{tpu_custom_call.1} parent=71 // pred_region
          %v749 = vld [vmem:[#allocation4] sm:$0xff]
          %v750 = vsel %vm616, %v749, 0.0
          %v751 = vrot.slane %v750, 4
          %v752 = vadd.f32 %v750, %v751
          %v753 = vrot.slane %v752, 2
          %v754 = vadd.f32 %v752, %v753
          %v755 = vrot.slane %v754, 1
          %v756 = vadd.f32 %v754, %v755
          %v757 = vld [vmem:[#allocation3] sm:$0x1]
          %759 = vset.pattern.permute.xlu0 0
          %760 = vperm.xlu0 %759, %v757
          %v761 = vpop.permute.xlu0 %760
          %v763 = vlaneseq
          %v764 = vshrl.u32 %v763, 7
          %v765 = vsub.s32 0, %v764
          %v766 = vrot.slane %v761, %v765
          %v767 = vrcp.pop %v766
          %v768 = vmul.f32 %v756, %v767
          %v769 = vsel %vm616, %v768, 0.0
          %770 = vadd.xlane.f32.xlu0 %v769
          %v771 = vpop.xlane.xlu0 %770
          %v772 = vrcp.pop 32.0
          %v773 = vmul.f32 %v771, %v772
          %v774 = vsub.f32 %v768, %v773
          %v775 = vmul.f32 %v774, %v774
          %v776 = vsel %vm616, %v775, 0.0
          %777 = vadd.xlane.f32.xlu0 %v776
          %v778 = vpop.xlane.xlu0 %777
          %v779 = vmul.f32 %v778, %v772
          %v780 = vadd.f32 %v779, 1e-05
          %v781 = vrsqrt.pop %v780
          %v782 = vmul.f32 %v774, %v781
          %v783 = vld [vmem:[%s7] sm:$0x1]
          %v784 = vmul.f32 %v782, %v783
          %v785 = vld [vmem:[%s8] sm:$0x1]
          %v786 = vadd.f32 %v784, %v785
          %v787 = vld [vmem:[%s9] sm:$0xff]
          %v788 = vld [vmem:[%s9 + $0x8] sm:$0xff]
          %v789 = vld [vmem:[%s9 + $0x10] sm:$0xff]
          %v790 = vld [vmem:[%s9 + $0x18] sm:$0xff]
          %v791 = vld [vmem:[%s10] sm:$0x1]
          %v793 = vsel %vm616, %v786, 0
          %795 = vmatprep.subr.mxu0 0.0
          %796 = vmatpush1.msra.mxu0 %v787
          %797 = vmatprep.subr.mxu0 0.0
          %798 = vmatpush1.msra.mxu0 %v788
          %799 = vmatprep.subr.mxu0 0.0
          %800 = vmatpush1.msra.mxu0 %v789
          %801 = vmatprep.subr.mxu0 0.0
          %802 = vmatpush1.msra.mxu0 %v790
          %803 = vmatprep.subr.mxu0 0.0
          %804 = vmatpush1.msra.mxu0 0.0
          %805 = vmatprep.subr.mxu0 0.0
          %806 = vmatpush1.msra.mxu0 0.0
          %807 = vmatprep.subr.mxu0 0.0
          %808 = vmatpush1.msra.mxu0 0.0
          %809 = vmatprep.subr.mxu0 0.0
          %810 = vmatpush1.msra.mxu0 0.0
          %811 = vmatprep.subr.mxu0 0.0
          %812 = vmatpush1.msra.mxu0 0.0
          %813 = vmatprep.subr.mxu0 0.0
          %814 = vmatpush1.msra.mxu0 0.0
          %815 = vmatprep.subr.mxu0 0.0
          %816 = vmatpush1.msra.mxu0 0.0
          %817 = vmatprep.subr.mxu0 0.0
          %818 = vmatpush1.msra.mxu0 0.0
          %819 = vmatprep.subr.mxu0 0.0
          %820 = vmatpush1.msra.mxu0 0.0
          %821 = vmatprep.subr.mxu0 0.0
          %822 = vmatpush1.msra.mxu0 0.0
          %823 = vmatprep.subr.mxu0 0.0
          %824 = vmatpush1.msra.mxu0 0.0
          %825 = vmatprep.subr.mxu0 0.0
          %826 = vmatpush1.msra.mxu0 0.0
          %827 = vmatprep.subr.mxu0 0.0
          %828 = vmatpush1.msra.mxu0 0.0
          %829 = vmatprep.subr.mxu0 0.0
          %830 = vmatpush1.msra.mxu0 0.0
          %831 = vmatprep.subr.mxu0 0.0
          %832 = vmatpush1.msra.mxu0 0.0
          %833 = vmatprep.subr.mxu0 0.0
          %834 = vmatpush1.msra.mxu0 0.0
          %835 = vmatprep.subr.mxu0 0.0
          %836 = vmatpush1.msra.mxu0 0.0
          %837 = vmatprep.subr.mxu0 0.0
          %838 = vmatpush1.msra.mxu0 0.0
          %839 = vmatprep.subr.mxu0 0.0
          %840 = vmatpush1.msra.mxu0 0.0
          %841 = vmatprep.subr.mxu0 0.0
          %842 = vmatpush1.msra.mxu0 0.0
          %843 = vmatprep.subr.mxu0 0.0
          %844 = vmatpush1.msra.mxu0 0.0
          %845 = vmatprep.subr.mxu0 0.0
          %846 = vmatpush1.msra.mxu0 0.0
          %847 = vmatprep.subr.mxu0 0.0
          %848 = vmatpush1.msra.mxu0 0.0
          %849 = vmatprep.subr.mxu0 0.0
          %850 = vmatpush1.msra.mxu0 0.0
          %851 = vmatprep.subr.mxu0 0.0
          %852 = vmatpush1.msra.mxu0 0.0
          %853 = vmatprep.subr.mxu0 0.0
          %854 = vmatpush1.msra.mxu0 0.0
          %855 = vmatprep.subr.mxu0 0.0
          %856 = vmatpush1.msra.mxu0 0.0
          %857 = vmatprep.subr.mxu0 0.0
          %858 = vmatpush1.msra.mxu0 0.0
          %859 = vmatprep.mubr.f32.mxu0 0.0
          %860 = vmatmul.mubr.f32.gmra.mrb[0].mxu0 %v793
          %v861 = vpop.f32.mrb[0].mxu0
          %v862 = vadd.f32 %v791, %v861
          %v863 = vpop.f32.mrb[0].mxu0
          %864 = vdwg.mxu0
          %v865 = vxor.u32 %v862, 2147483648
          %v866 = vmul.f32 %v865, 1.442695
          %v867 = vpow.pop %v866
          %v868 = vadd.f32 %v867, 1.0
          %v869 = vrcp.pop %v868
          %v870 = vmul.f32 1.0, %v869
          %v871 = vld [vmem:[%s11] sm:$0xff]
          %v872 = vld [vmem:[%s11 + $0x8] sm:$0xff]
          %v873 = vld [vmem:[%s12] sm:$0x1]
          %vm874 = vcmask 130048
          %v876 = vsel %vm874, %v870, 0
          %878 = vmatprep.subr.mxu0 0.0
          %879 = vmatpush1.msra.mxu0 %v871
          %880 = vmatprep.subr.mxu0 0.0
          %881 = vmatpush1.msra.mxu0 %v872
          %882 = vmatprep.subr.mxu0 0.0
          %883 = vmatpush1.msra.mxu0 0.0
          %884 = vmatprep.subr.mxu0 0.0
          %885 = vmatpush1.msra.mxu0 0.0
          %886 = vmatprep.subr.mxu0 0.0
          %887 = vmatpush1.msra.mxu0 0.0
          %888 = vmatprep.subr.mxu0 0.0
          %889 = vmatpush1.msra.mxu0 0.0
          %890 = vmatprep.subr.mxu0 0.0
          %891 = vmatpush1.msra.mxu0 0.0
          %892 = vmatprep.subr.mxu0 0.0
          %893 = vmatpush1.msra.mxu0 0.0
          %894 = vmatprep.subr.mxu0 0.0
          %895 = vmatpush1.msra.mxu0 0.0
          %896 = vmatprep.subr.mxu0 0.0
          %897 = vmatpush1.msra.mxu0 0.0
          %898 = vmatprep.subr.mxu0 0.0
          %899 = vmatpush1.msra.mxu0 0.0
          %900 = vmatprep.subr.mxu0 0.0
          %901 = vmatpush1.msra.mxu0 0.0
          %902 = vmatprep.subr.mxu0 0.0
          %903 = vmatpush1.msra.mxu0 0.0
          %904 = vmatprep.subr.mxu0 0.0
          %905 = vmatpush1.msra.mxu0 0.0
          %906 = vmatprep.subr.mxu0 0.0
          %907 = vmatpush1.msra.mxu0 0.0
          %908 = vmatprep.subr.mxu0 0.0
          %909 = vmatpush1.msra.mxu0 0.0
          %910 = vmatprep.subr.mxu0 0.0
          %911 = vmatpush1.msra.mxu0 0.0
          %912 = vmatprep.subr.mxu0 0.0
          %913 = vmatpush1.msra.mxu0 0.0
          %914 = vmatprep.subr.mxu0 0.0
          %915 = vmatpush1.msra.mxu0 0.0
          %916 = vmatprep.subr.mxu0 0.0
          %917 = vmatpush1.msra.mxu0 0.0
          %918 = vmatprep.subr.mxu0 0.0
          %919 = vmatpush1.msra.mxu0 0.0
          %920 = vmatprep.subr.mxu0 0.0
          %921 = vmatpush1.msra.mxu0 0.0
          %922 = vmatprep.subr.mxu0 0.0
          %923 = vmatpush1.msra.mxu0 0.0
          %924 = vmatprep.subr.mxu0 0.0
          %925 = vmatpush1.msra.mxu0 0.0
          %926 = vmatprep.subr.mxu0 0.0
          %927 = vmatpush1.msra.mxu0 0.0
          %928 = vmatprep.subr.mxu0 0.0
          %929 = vmatpush1.msra.mxu0 0.0
          %930 = vmatprep.subr.mxu0 0.0
          %931 = vmatpush1.msra.mxu0 0.0
          %932 = vmatprep.subr.mxu0 0.0
          %933 = vmatpush1.msra.mxu0 0.0
          %934 = vmatprep.subr.mxu0 0.0
          %935 = vmatpush1.msra.mxu0 0.0
          %936 = vmatprep.subr.mxu0 0.0
          %937 = vmatpush1.msra.mxu0 0.0
          %938 = vmatprep.subr.mxu0 0.0
          %939 = vmatpush1.msra.mxu0 0.0
          %940 = vmatprep.subr.mxu0 0.0
          %941 = vmatpush1.msra.mxu0 0.0
          %942 = vmatprep.mubr.f32.mxu0 0.0
          %943 = vmatmul.mubr.f32.gmra.mrb[0].mxu0 %v876
          %v944 = vpop.f32.mrb[0].mxu0
          %v945 = vadd.f32 %v873, %v944
          %v946 = vpop.f32.mrb[0].mxu0
          %947 = vdwg.mxu0
          %vm948 = vcmask 8192
          %949 = vst.msk [vmem:[%s483] sm:$0x1] %vm948, %v945
          %vm950 = vcmask 253952
          %951 = vst.msk [vmem:[%s489] sm:$0x1] %vm950, %v768
        $region80: #{tpu_custom_call.1} parent=71 // pred_fallthru
          _
        %s952 = sand.u32 %s334, 1
        %s953 = scalar_lea.sflag [#allocation7], %s952
        %s954 = sand.u32 %s334, 1
        %s955 = scalar_lea.vmem [#allocation6], %s954
        %s956 = sand.u32 %s360, 1
        %s957 = scalar_lea.sflag [#allocation9], %s956
        %s958 = sand.u32 %s360, 1
        %s959 = scalar_lea.vmem [#allocation8], %s958
        // Predicated region
        $region81: #{tpu_custom_call.1} parent=71 // pred_check
          %p960 = pneg %p344
        $region82: #{tpu_custom_call.1} parent=71 // pred_check_branch
          %962 = sbr.rel (%p960) target = $region84
        $region83: #{tpu_custom_call.1} parent=71 // pred_region
          %s964 = ssub.s32 16, 16
          %965 = vsyncadd %s953, %s964
          %s966 = smul.addr %s38, 16
          %s967 = scalar_lea.hbm %s13, %s966
          %s969 = sshll.u32 %s955, 4
          %s970 = int_to_ptr.vmem [resolvable:$true] %s969
          %972 = dma.vmem_to_hbm [thread:$0]  %s970, 16, %s967, %s953
        $region84: #{tpu_custom_call.1} parent=71 // pred_fallthru
          _
        // Predicated region
        $region85: #{tpu_custom_call.1} parent=71 // pred_check
          %p973 = pneg %p370
        $region86: #{tpu_custom_call.1} parent=71 // pred_check_branch
          %975 = sbr.rel (%p973) target = $region88
        $region87: #{tpu_custom_call.1} parent=71 // pred_region
          %s977 = ssub.s32 16, 16
          %978 = vsyncadd %s957, %s977
          %s979 = smul.addr %s38, 16
          %s980 = scalar_lea.hbm %s14, %s979
          %s982 = sshll.u32 %s959, 4
          %s983 = int_to_ptr.vmem [resolvable:$true] %s982
          %985 = dma.vmem_to_hbm [thread:$0]  %s983, 16, %s980, %s957
        $region88: #{tpu_custom_call.1} parent=71 // pred_fallthru
          _
      $region72: #{tpu_custom_call.1} parent=5 // pred_fallthru
        _
      %p986 = scmp.le.s32.totalorder 2, %s29
      // Predicated region
      $region89: #{tpu_custom_call.1} parent=5 // pred_check
        %p987 = pneg %p986
      $region90: #{tpu_custom_call.1} parent=5 // pred_check_branch
        %989 = sbr.rel (%p987) target = $region92
      $region91: #{tpu_custom_call.1} parent=5 // pred_region
        %s990 = ssub.s32 %s29, 2
        // Predicated region
        $region93: #{tpu_custom_call.1} parent=91 // pred_check
          %p991 = pneg %p350
        $region94: #{tpu_custom_call.1} parent=91 // pred_check_branch
          %993 = sbr.rel (%p991) target = $region96
        $region95: #{tpu_custom_call.1} parent=91 // pred_region
          %s994 = sand.u32 %s335, 1
          %s995 = scalar_lea.sflag [#allocation7], %s994
          %s996 = sand.u32 %s335, 1
          %s997 = scalar_lea.vmem [#allocation6], %s996
          %998 = dma.done %s995, 16
        $region96: #{tpu_custom_call.1} parent=91 // pred_fallthru
          _
        // Predicated region
        $region97: #{tpu_custom_call.1} parent=91 // pred_check
          %p999 = pneg %p376
        $region98: #{tpu_custom_call.1} parent=91 // pred_check_branch
          %1001 = sbr.rel (%p999) target = $region100
        $region99: #{tpu_custom_call.1} parent=91 // pred_region
          %s1002 = sand.u32 %s361, 1
          %s1003 = scalar_lea.sflag [#allocation9], %s1002
          %s1004 = sand.u32 %s361, 1
          %s1005 = scalar_lea.vmem [#allocation8], %s1004
          %1006 = dma.done %s1003, 16
        $region100: #{tpu_custom_call.1} parent=91 // pred_fallthru
          _
      $region92: #{tpu_custom_call.1} parent=5 // pred_fallthru
        _
    $region6: #{tpu_custom_call.1} parent=1 // loop_footer
      %s33 = sadd.s32 1, %s29
    $region7: #{tpu_custom_call.1} parent=1 // loop_footer_branch
      %28 = sbr.rel target = $region3
    $region8: #{tpu_custom_call.1} parent=1 // loop_exit
      _
    %1007 = vsyncpa [#allocation7], 1
    %s1008 = scalar_lea.sflag [#allocation7], 1
    %1009 = vsyncpa %s1008, 1
    %1010 = vsyncpa [#allocation9], 1
    %s1011 = scalar_lea.sflag [#allocation9], 1
    %1012 = vsyncpa %s1011, 1

</llo_original>
